<compile_context>
chip_gen: v5e
topology: v5e:2x2
jax: 0.10.0
libtpu: 0.0.40
codegen_flags: <defaults>
</compile_context>

<pallas_src>
import functools

import numpy as np
import jax
import jax.numpy as jnp
from jax import lax
from jax.experimental import pallas as pl
from jax.experimental.pallas import tpu as pltpu


# ------------------------------ fused kernel --------------------------------

def net12_fused_kernel(x_ref, wim_ref, wf_ref, bf_ref, o_ref,
                       xi_ref, conv_ref, fcin_ref):
    # x_ref   : (TB, 3, 11, 11) f32   NCHW input block
    # wim_ref : (384, 1296)     bf16  unrolled-conv matrix
    #                                 row = h_in*33 + c*11 + w_in (363 used)
    #                                 col = (h_out*9 + w_out)*16 + o
    # wf_ref  : (256, 128)      bf16  fc weight, row = (i*4+j)*16 + o, cols 2.. = 0
    # bf_ref  : (1, 128)        f32   effective fc bias (conv bias folded in)
    # o_ref   : (TB, 128)       f32   lane-dense output (cols 0..1 = logits)
    # xi_ref  : (TB, 384)       f32   scratch: lane-packed image
    # conv_ref: (TB, 1296)      f32   scratch: conv output
    # fcin_ref: (TB, 256)       f32   scratch: pooled features, (i*4+j)*16 + o

    # 1) pack NCHW -> lane-dense flattened image (lane = h*33 + c*11 + w).
    xi_ref[...] = jnp.zeros_like(xi_ref)          # zero K-padding lanes 363..383
    for c in range(3):
        for h in range(11):
            s = h * 33 + c * 11
            xi_ref[:, s:s + 11] = x_ref[:, c, h, :]

    # 2) the whole 3x3 conv as ONE MXU matmul (bf16 operands, f32 accumulate).
    conv_ref[...] = jnp.dot(xi_ref[...].astype(jnp.bfloat16), wim_ref[...],
                            preferred_element_type=jnp.float32)

    # 3) 3x3 / stride-2 max-pool as two shifted pairwise-max passes (VPU only).
    #    conv lane index = h*144 + w*16 + o.
    a = jnp.maximum(jnp.maximum(conv_ref[:, 0:1008], conv_ref[:, 144:1152]),
                    conv_ref[:, 288:1296])            # max over kh (valid h<=6)
    m = jnp.maximum(jnp.maximum(a[:, 0:976], a[:, 16:992]),
                    a[:, 32:1008])                    # max over kw (valid w<=6)

    # 4) slot the 16 pooled (TB,16) tiles into a lane-dense (TB,256) FC input.
    for i in range(4):
        for j in range(4):
            src = i * 288 + j * 32                    # lane of pooled (h=2i, w=2j)
            dst = (i * 4 + j) * 16
            fcin_ref[:, dst:dst + 16] = m[:, src:src + 16]

    # 5) single FC matmul + bias; lane-dense (TB,128) store.
    o_ref[...] = (jnp.dot(fcin_ref[...].astype(jnp.bfloat16), wf_ref[...],
                          preferred_element_type=jnp.float32)
                  + bf_ref[...])


# ------------------------------ JAX wrappers ---------------------------------

def prepare_params(w_conv, b_conv, w_fc, b_fc):
    """One-time (offline) weight re-layout; the hot path has no shuffles."""
    wc = np.asarray(w_conv, np.float32)    # (16, 3, 3, 3) OIHW
    wf = np.asarray(w_fc, np.float32)      # (2, 256)
    bc = np.asarray(b_conv, np.float32)    # (16,)
    bf = np.asarray(b_fc, np.float32)      # (2,)

    # Unrolled-conv (Toeplitz) matrix: conv(TB,1296) = X(TB,384) @ Wim(384,1296).
    wim = np.zeros((384, 1296), np.float32)
    for c in range(3):
        for kh in range(3):
            for kw in range(3):
                for ho in range(9):
                    for wo in range(9):
                        row = (ho + kh) * 33 + c * 11 + (wo + kw)
                        col = (ho * 9 + wo) * 16
                        wim[row, col:col + 16] = wc[:, c, kh, kw]

    # FC weight: torch flat index c*16 + i*4 + j -> kernel order (i*4+j)*16 + c,
    # lane-padded to 128 columns (cols 2.. stay exactly zero).
    wf_perm = np.transpose(wf.reshape(2, 16, 4, 4), (2, 3, 1, 0)).reshape(256, 2)
    wf_pad = np.zeros((256, 128), np.float32)
    wf_pad[:, :2] = wf_perm

    # Conv bias folded past the max-pool (constant per channel) and through the
    # linear FC into an effective FC bias.
    bc_flat = np.tile(bc, 16)                         # index (i*4+j)*16 + c
    bf_eff = bf + bc_flat @ wf_perm                   # (2,)
    bf_pad = np.zeros((1, 128), np.float32)
    bf_pad[0, :2] = bf_eff

    return (jnp.asarray(wim, dtype=jnp.bfloat16),
            jnp.asarray(wf_pad, dtype=jnp.bfloat16),
            jnp.asarray(bf_pad, dtype=jnp.float32))


@functools.partial(jax.jit, static_argnames=("tb",))
def net12_forward(x, wim, wf_pad, bf_pad, *, tb=128):
    # tb: batch tile.  128 fills a v5e MXU pass and keeps VMEM well under the
    # v7x 32 MiB scoped default; use tb=256 on v6e to fill the 256-wide MXU.
    B = x.shape[0]
    TB = min(tb, B)
    Bp = pl.cdiv(B, TB) * TB
    if Bp != B:
        x = jnp.pad(x, ((0, Bp - B), (0, 0), (0, 0), (0, 0)))
    out = pl.pallas_call(
        net12_fused_kernel,
        out_shape=jax.ShapeDtypeStruct((Bp, 128), jnp.float32),
        grid_spec=pltpu.PrefetchScalarGridSpec(
            num_scalar_prefetch=0,
            grid=(Bp // TB,),
            in_specs=[
                pl.BlockSpec((TB, 3, 11, 11), lambda b: (b, 0, 0, 0)),
                pl.BlockSpec((384, 1296), lambda b: (0, 0)),   # resident weights
                pl.BlockSpec((256, 128), lambda b: (0, 0)),
                pl.BlockSpec((1, 128), lambda b: (0, 0)),
            ],
            out_specs=pl.BlockSpec((TB, 128), lambda b: (b, 0)),
            scratch_shapes=[
                pltpu.VMEM((TB, 384), jnp.float32),
                pltpu.VMEM((TB, 1296), jnp.float32),
                pltpu.VMEM((TB, 256), jnp.float32),
            ]),
        compiler_params=pltpu.CompilerParams(
            dimension_semantics=("parallel",)),
    )(x, wim, wf_pad, bf_pad)
    return out[:B, :2]


def net12_reference(x, params):
    """Pure-XLA reference for validation (torch-layout parameters)."""
    w_conv, b_conv, w_fc, b_fc = params
    conv = lax.conv_general_dilated(
        x, w_conv, window_strides=(1, 1), padding="VALID",
        dimension_numbers=("NCHW", "OIHW", "NCHW"))
    conv = conv + b_conv[None, :, None, None]
    pooled = lax.reduce_window(
        conv, -jnp.inf, lax.max,
        window_dimensions=(1, 1, 3, 3), window_strides=(1, 1, 2, 2),
        padding="VALID")
    flat = pooled.reshape(pooled.shape[0], -1)
    return flat @ w_fc.T + b_fc


# ---------------------------------- main -------------------------------------

if __name__ == "__main__":
    key = jax.random.PRNGKey(0)
    kx, kw1, kb1, kw2, kb2 = jax.random.split(key, 5)

    # input consistent with fc(4*4*16, 2): (B, 3, 11, 11) NCHW
    x = jax.random.normal(kx, (2, 3, 11, 11), dtype=jnp.float32)

    # deterministic parameters in torch layout
    w_conv = 0.1 * jax.random.normal(kw1, (16, 3, 3, 3), dtype=jnp.float32)
    b_conv = 0.1 * jax.random.normal(kb1, (16,), dtype=jnp.float32)
    w_fc = 0.1 * jax.random.normal(kw2, (2, 256), dtype=jnp.float32)
    b_fc = 0.1 * jax.random.normal(kb2, (2,), dtype=jnp.float32)

    # one-time weight re-layout (outside the hot path)
    wim, wf_pad, bf_pad = prepare_params(w_conv, b_conv, w_fc, b_fc)

    out = jax.block_until_ready(net12_forward(x, wim, wf_pad, bf_pad))
    ref = jax.block_until_ready(net12_reference(x, (w_conv, b_conv, w_fc, b_fc)))

    assert out.shape == (2, 2), out.shape
    # bf16 MXU operands -> tolerance looser than pure-f32 (~5e-3 expected error;
    # a layout/permutation bug would be O(1), so this still catches real bugs).
    assert jnp.allclose(out, ref, rtol=2e-2, atol=2e-2), (out, ref)
    print("KERNEL_OK")
</pallas_src>

<mosaic_0001>
module attributes {stable_mosaic.version = 11 : i64} {
  func.func @net12_fused_kernel(%arg0: i32, %arg1: memref<2x3x11x11xf32, #tpu.memory_space<vmem>>, %arg2: memref<384x1296xbf16, #tpu.memory_space<vmem>>, %arg3: memref<256x128xbf16, #tpu.memory_space<vmem>>, %arg4: memref<1x128xf32, #tpu.memory_space<vmem>>, %arg5: memref<2x128xf32, #tpu.memory_space<vmem>>, %arg6: memref<2x384xf32, #tpu.memory_space<vmem>>, %arg7: memref<2x1296xf32, #tpu.memory_space<vmem>>, %arg8: memref<2x256xf32, #tpu.memory_space<vmem>>) attributes {dimension_semantics = [#tpu.dimension_semantics<parallel>], iteration_bounds = array<i64: 1>, scalar_prefetch = 0 : i64, scratch_operands = 3 : i64, tpu.core_type = #tpu.core_type<tc>, window_params = [{transform_indices = @transform_0, window_bounds = array<i64: 2, 3, 11, 11>}, {pipeline_mode = #tpu.pipeline_mode<synchronous>, transform_indices = @transform_1, window_bounds = array<i64: 384, 1296>}, {pipeline_mode = #tpu.pipeline_mode<synchronous>, transform_indices = @transform_2, window_bounds = array<i64: 256, 128>}, {pipeline_mode = #tpu.pipeline_mode<synchronous>, transform_indices = @transform_3, window_bounds = array<i64: 1, 128>}, {transform_indices = @transform_4, window_bounds = array<i64: 2, 128>}]} {
    %cst = arith.constant 0.000000e+00 : f32
    %0 = vector.broadcast %cst : f32 to vector<2x384xf32>
    %c0 = arith.constant 0 : index
    %c0_0 = arith.constant 0 : index
    %1 = vector.load %arg6[%c0, %c0_0] : memref<2x384xf32, #tpu.memory_space<vmem>>, vector<2x384xf32>
    tpu.vector_store %arg6[%c0, %c0_0], %0 {strides = array<i32>} : memref<2x384xf32, #tpu.memory_space<vmem>>, vector<2x384xf32>,
    %c0_1 = arith.constant 0 : index
    %c0_2 = arith.constant 0 : index
    %c0_3 = arith.constant 0 : index
    %c0_4 = arith.constant 0 : index
    %2 = vector.load %arg1[%c0_1, %c0_2, %c0_3, %c0_4] : memref<2x3x11x11xf32, #tpu.memory_space<vmem>>, vector<2x1x1x11xf32>
    %3 = vector.shape_cast %2 : vector<2x1x1x11xf32> to vector<2x11xf32>
    %c0_5 = arith.constant 0 : index
    %c0_6 = arith.constant 0 : index
    %4 = vector.load %arg6[%c0_5, %c0_6] : memref<2x384xf32, #tpu.memory_space<vmem>>, vector<2x11xf32>
    tpu.vector_store %arg6[%c0_5, %c0_6], %3 {strides = array<i32>} : memref<2x384xf32, #tpu.memory_space<vmem>>, vector<2x11xf32>,
    %c0_7 = arith.constant 0 : index
    %c0_8 = arith.constant 0 : index
    %c1 = arith.constant 1 : index
    %c0_9 = arith.constant 0 : index
    %5 = vector.load %arg1[%c0_7, %c0_8, %c1, %c0_9] : memref<2x3x11x11xf32, #tpu.memory_space<vmem>>, vector<2x1x1x11xf32>
    %6 = vector.shape_cast %5 : vector<2x1x1x11xf32> to vector<2x11xf32>
    %c0_10 = arith.constant 0 : index
    %c33 = arith.constant 33 : index
    %7 = vector.load %arg6[%c0_10, %c33] : memref<2x384xf32, #tpu.memory_space<vmem>>, vector<2x11xf32>
    tpu.vector_store %arg6[%c0_10, %c33], %6 {strides = array<i32>} : memref<2x384xf32, #tpu.memory_space<vmem>>, vector<2x11xf32>,
    %c0_11 = arith.constant 0 : index
    %c0_12 = arith.constant 0 : index
    %c2 = arith.constant 2 : index
    %c0_13 = arith.constant 0 : index
    %8 = vector.load %arg1[%c0_11, %c0_12, %c2, %c0_13] : memref<2x3x11x11xf32, #tpu.memory_space<vmem>>, vector<2x1x1x11xf32>
    %9 = vector.shape_cast %8 : vector<2x1x1x11xf32> to vector<2x11xf32>
    %c0_14 = arith.constant 0 : index
    %c66 = arith.constant 66 : index
    %10 = vector.load %arg6[%c0_14, %c66] : memref<2x384xf32, #tpu.memory_space<vmem>>, vector<2x11xf32>
    tpu.vector_store %arg6[%c0_14, %c66], %9 {strides = array<i32>} : memref<2x384xf32, #tpu.memory_space<vmem>>, vector<2x11xf32>,
    %c0_15 = arith.constant 0 : index
    %c0_16 = arith.constant 0 : index
    %c3 = arith.constant 3 : index
    %c0_17 = arith.constant 0 : index
    %11 = vector.load %arg1[%c0_15, %c0_16, %c3, %c0_17] : memref<2x3x11x11xf32, #tpu.memory_space<vmem>>, vector<2x1x1x11xf32>
    %12 = vector.shape_cast %11 : vector<2x1x1x11xf32> to vector<2x11xf32>
    %c0_18 = arith.constant 0 : index
    %c99 = arith.constant 99 : index
    %13 = vector.load %arg6[%c0_18, %c99] : memref<2x384xf32, #tpu.memory_space<vmem>>, vector<2x11xf32>
    tpu.vector_store %arg6[%c0_18, %c99], %12 {strides = array<i32>} : memref<2x384xf32, #tpu.memory_space<vmem>>, vector<2x11xf32>,
    %c0_19 = arith.constant 0 : index
    %c0_20 = arith.constant 0 : index
    %c4 = arith.constant 4 : index
    %c0_21 = arith.constant 0 : index
    %14 = vector.load %arg1[%c0_19, %c0_20, %c4, %c0_21] : memref<2x3x11x11xf32, #tpu.memory_space<vmem>>, vector<2x1x1x11xf32>
    %15 = vector.shape_cast %14 : vector<2x1x1x11xf32> to vector<2x11xf32>
    %c0_22 = arith.constant 0 : index
    %c132 = arith.constant 132 : index
    %16 = vector.load %arg6[%c0_22, %c132] : memref<2x384xf32, #tpu.memory_space<vmem>>, vector<2x11xf32>
    tpu.vector_store %arg6[%c0_22, %c132], %15 {strides = array<i32>} : memref<2x384xf32, #tpu.memory_space<vmem>>, vector<2x11xf32>,
    %c0_23 = arith.constant 0 : index
    %c0_24 = arith.constant 0 : index
    %c5 = arith.constant 5 : index
    %c0_25 = arith.constant 0 : index
    %17 = vector.load %arg1[%c0_23, %c0_24, %c5, %c0_25] : memref<2x3x11x11xf32, #tpu.memory_space<vmem>>, vector<2x1x1x11xf32>
    %18 = vector.shape_cast %17 : vector<2x1x1x11xf32> to vector<2x11xf32>
    %c0_26 = arith.constant 0 : index
    %c165 = arith.constant 165 : index
    %19 = vector.load %arg6[%c0_26, %c165] : memref<2x384xf32, #tpu.memory_space<vmem>>, vector<2x11xf32>
    tpu.vector_store %arg6[%c0_26, %c165], %18 {strides = array<i32>} : memref<2x384xf32, #tpu.memory_space<vmem>>, vector<2x11xf32>,
    %c0_27 = arith.constant 0 : index
    %c0_28 = arith.constant 0 : index
    %c6 = arith.constant 6 : index
    %c0_29 = arith.constant 0 : index
    %20 = vector.load %arg1[%c0_27, %c0_28, %c6, %c0_29] : memref<2x3x11x11xf32, #tpu.memory_space<vmem>>, vector<2x1x1x11xf32>
    %21 = vector.shape_cast %20 : vector<2x1x1x11xf32> to vector<2x11xf32>
    %c0_30 = arith.constant 0 : index
    %c198 = arith.constant 198 : index
    %22 = vector.load %arg6[%c0_30, %c198] : memref<2x384xf32, #tpu.memory_space<vmem>>, vector<2x11xf32>
    tpu.vector_store %arg6[%c0_30, %c198], %21 {strides = array<i32>} : memref<2x384xf32, #tpu.memory_space<vmem>>, vector<2x11xf32>,
    %c0_31 = arith.constant 0 : index
    %c0_32 = arith.constant 0 : index
    %c7 = arith.constant 7 : index
    %c0_33 = arith.constant 0 : index
    %23 = vector.load %arg1[%c0_31, %c0_32, %c7, %c0_33] : memref<2x3x11x11xf32, #tpu.memory_space<vmem>>, vector<2x1x1x11xf32>
    %24 = vector.shape_cast %23 : vector<2x1x1x11xf32> to vector<2x11xf32>
    %c0_34 = arith.constant 0 : index
    %c231 = arith.constant 231 : index
    %25 = vector.load %arg6[%c0_34, %c231] : memref<2x384xf32, #tpu.memory_space<vmem>>, vector<2x11xf32>
    tpu.vector_store %arg6[%c0_34, %c231], %24 {strides = array<i32>} : memref<2x384xf32, #tpu.memory_space<vmem>>, vector<2x11xf32>,
    %c0_35 = arith.constant 0 : index
    %c0_36 = arith.constant 0 : index
    %c8 = arith.constant 8 : index
    %c0_37 = arith.constant 0 : index
    %26 = vector.load %arg1[%c0_35, %c0_36, %c8, %c0_37] : memref<2x3x11x11xf32, #tpu.memory_space<vmem>>, vector<2x1x1x11xf32>
    %27 = vector.shape_cast %26 : vector<2x1x1x11xf32> to vector<2x11xf32>
    %c0_38 = arith.constant 0 : index
    %c264 = arith.constant 264 : index
    %28 = vector.load %arg6[%c0_38, %c264] : memref<2x384xf32, #tpu.memory_space<vmem>>, vector<2x11xf32>
    tpu.vector_store %arg6[%c0_38, %c264], %27 {strides = array<i32>} : memref<2x384xf32, #tpu.memory_space<vmem>>, vector<2x11xf32>,
    %c0_39 = arith.constant 0 : index
    %c0_40 = arith.constant 0 : index
    %c9 = arith.constant 9 : index
    %c0_41 = arith.constant 0 : index
    %29 = vector.load %arg1[%c0_39, %c0_40, %c9, %c0_41] : memref<2x3x11x11xf32, #tpu.memory_space<vmem>>, vector<2x1x1x11xf32>
    %30 = vector.shape_cast %29 : vector<2x1x1x11xf32> to vector<2x11xf32>
    %c0_42 = arith.constant 0 : index
    %c297 = arith.constant 297 : index
    %31 = vector.load %arg6[%c0_42, %c297] : memref<2x384xf32, #tpu.memory_space<vmem>>, vector<2x11xf32>
    tpu.vector_store %arg6[%c0_42, %c297], %30 {strides = array<i32>} : memref<2x384xf32, #tpu.memory_space<vmem>>, vector<2x11xf32>,
    %c0_43 = arith.constant 0 : index
    %c0_44 = arith.constant 0 : index
    %c10 = arith.constant 10 : index
    %c0_45 = arith.constant 0 : index
    %32 = vector.load %arg1[%c0_43, %c0_44, %c10, %c0_45] : memref<2x3x11x11xf32, #tpu.memory_space<vmem>>, vector<2x1x1x11xf32>
    %33 = vector.shape_cast %32 : vector<2x1x1x11xf32> to vector<2x11xf32>
    %c0_46 = arith.constant 0 : index
    %c330 = arith.constant 330 : index
    %34 = vector.load %arg6[%c0_46, %c330] : memref<2x384xf32, #tpu.memory_space<vmem>>, vector<2x11xf32>
    tpu.vector_store %arg6[%c0_46, %c330], %33 {strides = array<i32>} : memref<2x384xf32, #tpu.memory_space<vmem>>, vector<2x11xf32>,
    %c0_47 = arith.constant 0 : index
    %c1_48 = arith.constant 1 : index
    %c0_49 = arith.constant 0 : index
    %c0_50 = arith.constant 0 : index
    %35 = vector.load %arg1[%c0_47, %c1_48, %c0_49, %c0_50] : memref<2x3x11x11xf32, #tpu.memory_space<vmem>>, vector<2x1x1x11xf32>
    %36 = vector.shape_cast %35 : vector<2x1x1x11xf32> to vector<2x11xf32>
    %c0_51 = arith.constant 0 : index
    %c11 = arith.constant 11 : index
    %37 = vector.load %arg6[%c0_51, %c11] : memref<2x384xf32, #tpu.memory_space<vmem>>, vector<2x11xf32>
    tpu.vector_store %arg6[%c0_51, %c11], %36 {strides = array<i32>} : memref<2x384xf32, #tpu.memory_space<vmem>>, vector<2x11xf32>,
    %c0_52 = arith.constant 0 : index
    %c1_53 = arith.constant 1 : index
    %c1_54 = arith.constant 1 : index
    %c0_55 = arith.constant 0 : index
    %38 = vector.load %arg1[%c0_52, %c1_53, %c1_54, %c0_55] : memref<2x3x11x11xf32, #tpu.memory_space<vmem>>, vector<2x1x1x11xf32>
    %39 = vector.shape_cast %38 : vector<2x1x1x11xf32> to vector<2x11xf32>
    %c0_56 = arith.constant 0 : index
    %c44 = arith.constant 44 : index
    %40 = vector.load %arg6[%c0_56, %c44] : memref<2x384xf32, #tpu.memory_space<vmem>>, vector<2x11xf32>
    tpu.vector_store %arg6[%c0_56, %c44], %39 {strides = array<i32>} : memref<2x384xf32, #tpu.memory_space<vmem>>, vector<2x11xf32>,
    %c0_57 = arith.constant 0 : index
    %c1_58 = arith.constant 1 : index
    %c2_59 = arith.constant 2 : index
    %c0_60 = arith.constant 0 : index
    %41 = vector.load %arg1[%c0_57, %c1_58, %c2_59, %c0_60] : memref<2x3x11x11xf32, #tpu.memory_space<vmem>>, vector<2x1x1x11xf32>
    %42 = vector.shape_cast %41 : vector<2x1x1x11xf32> to vector<2x11xf32>
    %c0_61 = arith.constant 0 : index
    %c77 = arith.constant 77 : index
    %43 = vector.load %arg6[%c0_61, %c77] : memref<2x384xf32, #tpu.memory_space<vmem>>, vector<2x11xf32>
    tpu.vector_store %arg6[%c0_61, %c77], %42 {strides = array<i32>} : memref<2x384xf32, #tpu.memory_space<vmem>>, vector<2x11xf32>,
    %c0_62 = arith.constant 0 : index
    %c1_63 = arith.constant 1 : index
    %c3_64 = arith.constant 3 : index
    %c0_65 = arith.constant 0 : index
    %44 = vector.load %arg1[%c0_62, %c1_63, %c3_64, %c0_65] : memref<2x3x11x11xf32, #tpu.memory_space<vmem>>, vector<2x1x1x11xf32>
    %45 = vector.shape_cast %44 : vector<2x1x1x11xf32> to vector<2x11xf32>
    %c0_66 = arith.constant 0 : index
    %c110 = arith.constant 110 : index
    %46 = vector.load %arg6[%c0_66, %c110] : memref<2x384xf32, #tpu.memory_space<vmem>>, vector<2x11xf32>
    tpu.vector_store %arg6[%c0_66, %c110], %45 {strides = array<i32>} : memref<2x384xf32, #tpu.memory_space<vmem>>, vector<2x11xf32>,
    %c0_67 = arith.constant 0 : index
    %c1_68 = arith.constant 1 : index
    %c4_69 = arith.constant 4 : index
    %c0_70 = arith.constant 0 : index
    %47 = vector.load %arg1[%c0_67, %c1_68, %c4_69, %c0_70] : memref<2x3x11x11xf32, #tpu.memory_space<vmem>>, vector<2x1x1x11xf32>
    %48 = vector.shape_cast %47 : vector<2x1x1x11xf32> to vector<2x11xf32>
    %c0_71 = arith.constant 0 : index
    %c143 = arith.constant 143 : index
    %49 = vector.load %arg6[%c0_71, %c143] : memref<2x384xf32, #tpu.memory_space<vmem>>, vector<2x11xf32>
    tpu.vector_store %arg6[%c0_71, %c143], %48 {strides = array<i32>} : memref<2x384xf32, #tpu.memory_space<vmem>>, vector<2x11xf32>,
    %c0_72 = arith.constant 0 : index
    %c1_73 = arith.constant 1 : index
    %c5_74 = arith.constant 5 : index
    %c0_75 = arith.constant 0 : index
    %50 = vector.load %arg1[%c0_72, %c1_73, %c5_74, %c0_75] : memref<2x3x11x11xf32, #tpu.memory_space<vmem>>, vector<2x1x1x11xf32>
    %51 = vector.shape_cast %50 : vector<2x1x1x11xf32> to vector<2x11xf32>
    %c0_76 = arith.constant 0 : index
    %c176 = arith.constant 176 : index
    %52 = vector.load %arg6[%c0_76, %c176] : memref<2x384xf32, #tpu.memory_space<vmem>>, vector<2x11xf32>
    tpu.vector_store %arg6[%c0_76, %c176], %51 {strides = array<i32>} : memref<2x384xf32, #tpu.memory_space<vmem>>, vector<2x11xf32>,
    %c0_77 = arith.constant 0 : index
    %c1_78 = arith.constant 1 : index
    %c6_79 = arith.constant 6 : index
    %c0_80 = arith.constant 0 : index
    %53 = vector.load %arg1[%c0_77, %c1_78, %c6_79, %c0_80] : memref<2x3x11x11xf32, #tpu.memory_space<vmem>>, vector<2x1x1x11xf32>
    %54 = vector.shape_cast %53 : vector<2x1x1x11xf32> to vector<2x11xf32>
    %c0_81 = arith.constant 0 : index
    %c209 = arith.constant 209 : index
    %55 = vector.load %arg6[%c0_81, %c209] : memref<2x384xf32, #tpu.memory_space<vmem>>, vector<2x11xf32>
    tpu.vector_store %arg6[%c0_81, %c209], %54 {strides = array<i32>} : memref<2x384xf32, #tpu.memory_space<vmem>>, vector<2x11xf32>,
    %c0_82 = arith.constant 0 : index
    %c1_83 = arith.constant 1 : index
    %c7_84 = arith.constant 7 : index
    %c0_85 = arith.constant 0 : index
    %56 = vector.load %arg1[%c0_82, %c1_83, %c7_84, %c0_85] : memref<2x3x11x11xf32, #tpu.memory_space<vmem>>, vector<2x1x1x11xf32>
    %57 = vector.shape_cast %56 : vector<2x1x1x11xf32> to vector<2x11xf32>
    %c0_86 = arith.constant 0 : index
    %c242 = arith.constant 242 : index
    %58 = vector.load %arg6[%c0_86, %c242] : memref<2x384xf32, #tpu.memory_space<vmem>>, vector<2x11xf32>
    tpu.vector_store %arg6[%c0_86, %c242], %57 {strides = array<i32>} : memref<2x384xf32, #tpu.memory_space<vmem>>, vector<2x11xf32>,
    %c0_87 = arith.constant 0 : index
    %c1_88 = arith.constant 1 : index
    %c8_89 = arith.constant 8 : index
    %c0_90 = arith.constant 0 : index
    %59 = vector.load %arg1[%c0_87, %c1_88, %c8_89, %c0_90] : memref<2x3x11x11xf32, #tpu.memory_space<vmem>>, vector<2x1x1x11xf32>
    %60 = vector.shape_cast %59 : vector<2x1x1x11xf32> to vector<2x11xf32>
    %c0_91 = arith.constant 0 : index
    %c275 = arith.constant 275 : index
    %61 = vector.load %arg6[%c0_91, %c275] : memref<2x384xf32, #tpu.memory_space<vmem>>, vector<2x11xf32>
    tpu.vector_store %arg6[%c0_91, %c275], %60 {strides = array<i32>} : memref<2x384xf32, #tpu.memory_space<vmem>>, vector<2x11xf32>,
    %c0_92 = arith.constant 0 : index
    %c1_93 = arith.constant 1 : index
    %c9_94 = arith.constant 9 : index
    %c0_95 = arith.constant 0 : index
    %62 = vector.load %arg1[%c0_92, %c1_93, %c9_94, %c0_95] : memref<2x3x11x11xf32, #tpu.memory_space<vmem>>, vector<2x1x1x11xf32>
    %63 = vector.shape_cast %62 : vector<2x1x1x11xf32> to vector<2x11xf32>
    %c0_96 = arith.constant 0 : index
    %c308 = arith.constant 308 : index
    %64 = vector.load %arg6[%c0_96, %c308] : memref<2x384xf32, #tpu.memory_space<vmem>>, vector<2x11xf32>
    tpu.vector_store %arg6[%c0_96, %c308], %63 {strides = array<i32>} : memref<2x384xf32, #tpu.memory_space<vmem>>, vector<2x11xf32>,
    %c0_97 = arith.constant 0 : index
    %c1_98 = arith.constant 1 : index
    %c10_99 = arith.constant 10 : index
    %c0_100 = arith.constant 0 : index
    %65 = vector.load %arg1[%c0_97, %c1_98, %c10_99, %c0_100] : memref<2x3x11x11xf32, #tpu.memory_space<vmem>>, vector<2x1x1x11xf32>
    %66 = vector.shape_cast %65 : vector<2x1x1x11xf32> to vector<2x11xf32>
    %c0_101 = arith.constant 0 : index
    %c341 = arith.constant 341 : index
    %67 = vector.load %arg6[%c0_101, %c341] : memref<2x384xf32, #tpu.memory_space<vmem>>, vector<2x11xf32>
    tpu.vector_store %arg6[%c0_101, %c341], %66 {strides = array<i32>} : memref<2x384xf32, #tpu.memory_space<vmem>>, vector<2x11xf32>,
    %c0_102 = arith.constant 0 : index
    %c2_103 = arith.constant 2 : index
    %c0_104 = arith.constant 0 : index
    %c0_105 = arith.constant 0 : index
    %68 = vector.load %arg1[%c0_102, %c2_103, %c0_104, %c0_105] : memref<2x3x11x11xf32, #tpu.memory_space<vmem>>, vector<2x1x1x11xf32>
    %69 = vector.shape_cast %68 : vector<2x1x1x11xf32> to vector<2x11xf32>
    %c0_106 = arith.constant 0 : index
    %c22 = arith.constant 22 : index
    %70 = vector.load %arg6[%c0_106, %c22] : memref<2x384xf32, #tpu.memory_space<vmem>>, vector<2x11xf32>
    tpu.vector_store %arg6[%c0_106, %c22], %69 {strides = array<i32>} : memref<2x384xf32, #tpu.memory_space<vmem>>, vector<2x11xf32>,
    %c0_107 = arith.constant 0 : index
    %c2_108 = arith.constant 2 : index
    %c1_109 = arith.constant 1 : index
    %c0_110 = arith.constant 0 : index
    %71 = vector.load %arg1[%c0_107, %c2_108, %c1_109, %c0_110] : memref<2x3x11x11xf32, #tpu.memory_space<vmem>>, vector<2x1x1x11xf32>
    %72 = vector.shape_cast %71 : vector<2x1x1x11xf32> to vector<2x11xf32>
    %c0_111 = arith.constant 0 : index
    %c55 = arith.constant 55 : index
    %73 = vector.load %arg6[%c0_111, %c55] : memref<2x384xf32, #tpu.memory_space<vmem>>, vector<2x11xf32>
    tpu.vector_store %arg6[%c0_111, %c55], %72 {strides = array<i32>} : memref<2x384xf32, #tpu.memory_space<vmem>>, vector<2x11xf32>,
    %c0_112 = arith.constant 0 : index
    %c2_113 = arith.constant 2 : index
    %c2_114 = arith.constant 2 : index
    %c0_115 = arith.constant 0 : index
    %74 = vector.load %arg1[%c0_112, %c2_113, %c2_114, %c0_115] : memref<2x3x11x11xf32, #tpu.memory_space<vmem>>, vector<2x1x1x11xf32>
    %75 = vector.shape_cast %74 : vector<2x1x1x11xf32> to vector<2x11xf32>
    %c0_116 = arith.constant 0 : index
    %c88 = arith.constant 88 : index
    %76 = vector.load %arg6[%c0_116, %c88] : memref<2x384xf32, #tpu.memory_space<vmem>>, vector<2x11xf32>
    tpu.vector_store %arg6[%c0_116, %c88], %75 {strides = array<i32>} : memref<2x384xf32, #tpu.memory_space<vmem>>, vector<2x11xf32>,
    %c0_117 = arith.constant 0 : index
    %c2_118 = arith.constant 2 : index
    %c3_119 = arith.constant 3 : index
    %c0_120 = arith.constant 0 : index
    %77 = vector.load %arg1[%c0_117, %c2_118, %c3_119, %c0_120] : memref<2x3x11x11xf32, #tpu.memory_space<vmem>>, vector<2x1x1x11xf32>
    %78 = vector.shape_cast %77 : vector<2x1x1x11xf32> to vector<2x11xf32>
    %c0_121 = arith.constant 0 : index
    %c121 = arith.constant 121 : index
    %79 = vector.load %arg6[%c0_121, %c121] : memref<2x384xf32, #tpu.memory_space<vmem>>, vector<2x11xf32>
    tpu.vector_store %arg6[%c0_121, %c121], %78 {strides = array<i32>} : memref<2x384xf32, #tpu.memory_space<vmem>>, vector<2x11xf32>,
    %c0_122 = arith.constant 0 : index
    %c2_123 = arith.constant 2 : index
    %c4_124 = arith.constant 4 : index
    %c0_125 = arith.constant 0 : index
    %80 = vector.load %arg1[%c0_122, %c2_123, %c4_124, %c0_125] : memref<2x3x11x11xf32, #tpu.memory_space<vmem>>, vector<2x1x1x11xf32>
    %81 = vector.shape_cast %80 : vector<2x1x1x11xf32> to vector<2x11xf32>
    %c0_126 = arith.constant 0 : index
    %c154 = arith.constant 154 : index
    %82 = vector.load %arg6[%c0_126, %c154] : memref<2x384xf32, #tpu.memory_space<vmem>>, vector<2x11xf32>
    tpu.vector_store %arg6[%c0_126, %c154], %81 {strides = array<i32>} : memref<2x384xf32, #tpu.memory_space<vmem>>, vector<2x11xf32>,
    %c0_127 = arith.constant 0 : index
    %c2_128 = arith.constant 2 : index
    %c5_129 = arith.constant 5 : index
    %c0_130 = arith.constant 0 : index
    %83 = vector.load %arg1[%c0_127, %c2_128, %c5_129, %c0_130] : memref<2x3x11x11xf32, #tpu.memory_space<vmem>>, vector<2x1x1x11xf32>
    %84 = vector.shape_cast %83 : vector<2x1x1x11xf32> to vector<2x11xf32>
    %c0_131 = arith.constant 0 : index
    %c187 = arith.constant 187 : index
    %85 = vector.load %arg6[%c0_131, %c187] : memref<2x384xf32, #tpu.memory_space<vmem>>, vector<2x11xf32>
    tpu.vector_store %arg6[%c0_131, %c187], %84 {strides = array<i32>} : memref<2x384xf32, #tpu.memory_space<vmem>>, vector<2x11xf32>,
    %c0_132 = arith.constant 0 : index
    %c2_133 = arith.constant 2 : index
    %c6_134 = arith.constant 6 : index
    %c0_135 = arith.constant 0 : index
    %86 = vector.load %arg1[%c0_132, %c2_133, %c6_134, %c0_135] : memref<2x3x11x11xf32, #tpu.memory_space<vmem>>, vector<2x1x1x11xf32>
    %87 = vector.shape_cast %86 : vector<2x1x1x11xf32> to vector<2x11xf32>
    %c0_136 = arith.constant 0 : index
    %c220 = arith.constant 220 : index
    %88 = vector.load %arg6[%c0_136, %c220] : memref<2x384xf32, #tpu.memory_space<vmem>>, vector<2x11xf32>
    tpu.vector_store %arg6[%c0_136, %c220], %87 {strides = array<i32>} : memref<2x384xf32, #tpu.memory_space<vmem>>, vector<2x11xf32>,
    %c0_137 = arith.constant 0 : index
    %c2_138 = arith.constant 2 : index
    %c7_139 = arith.constant 7 : index
    %c0_140 = arith.constant 0 : index
    %89 = vector.load %arg1[%c0_137, %c2_138, %c7_139, %c0_140] : memref<2x3x11x11xf32, #tpu.memory_space<vmem>>, vector<2x1x1x11xf32>
    %90 = vector.shape_cast %89 : vector<2x1x1x11xf32> to vector<2x11xf32>
    %c0_141 = arith.constant 0 : index
    %c253 = arith.constant 253 : index
    %91 = vector.load %arg6[%c0_141, %c253] : memref<2x384xf32, #tpu.memory_space<vmem>>, vector<2x11xf32>
    tpu.vector_store %arg6[%c0_141, %c253], %90 {strides = array<i32>} : memref<2x384xf32, #tpu.memory_space<vmem>>, vector<2x11xf32>,
    %c0_142 = arith.constant 0 : index
    %c2_143 = arith.constant 2 : index
    %c8_144 = arith.constant 8 : index
    %c0_145 = arith.constant 0 : index
    %92 = vector.load %arg1[%c0_142, %c2_143, %c8_144, %c0_145] : memref<2x3x11x11xf32, #tpu.memory_space<vmem>>, vector<2x1x1x11xf32>
    %93 = vector.shape_cast %92 : vector<2x1x1x11xf32> to vector<2x11xf32>
    %c0_146 = arith.constant 0 : index
    %c286 = arith.constant 286 : index
    %94 = vector.load %arg6[%c0_146, %c286] : memref<2x384xf32, #tpu.memory_space<vmem>>, vector<2x11xf32>
    tpu.vector_store %arg6[%c0_146, %c286], %93 {strides = array<i32>} : memref<2x384xf32, #tpu.memory_space<vmem>>, vector<2x11xf32>,
    %c0_147 = arith.constant 0 : index
    %c2_148 = arith.constant 2 : index
    %c9_149 = arith.constant 9 : index
    %c0_150 = arith.constant 0 : index
    %95 = vector.load %arg1[%c0_147, %c2_148, %c9_149, %c0_150] : memref<2x3x11x11xf32, #tpu.memory_space<vmem>>, vector<2x1x1x11xf32>
    %96 = vector.shape_cast %95 : vector<2x1x1x11xf32> to vector<2x11xf32>
    %c0_151 = arith.constant 0 : index
    %c319 = arith.constant 319 : index
    %97 = vector.load %arg6[%c0_151, %c319] : memref<2x384xf32, #tpu.memory_space<vmem>>, vector<2x11xf32>
    tpu.vector_store %arg6[%c0_151, %c319], %96 {strides = array<i32>} : memref<2x384xf32, #tpu.memory_space<vmem>>, vector<2x11xf32>,
    %c0_152 = arith.constant 0 : index
    %c2_153 = arith.constant 2 : index
    %c10_154 = arith.constant 10 : index
    %c0_155 = arith.constant 0 : index
    %98 = vector.load %arg1[%c0_152, %c2_153, %c10_154, %c0_155] : memref<2x3x11x11xf32, #tpu.memory_space<vmem>>, vector<2x1x1x11xf32>
    %99 = vector.shape_cast %98 : vector<2x1x1x11xf32> to vector<2x11xf32>
    %c0_156 = arith.constant 0 : index
    %c352 = arith.constant 352 : index
    %100 = vector.load %arg6[%c0_156, %c352] : memref<2x384xf32, #tpu.memory_space<vmem>>, vector<2x11xf32>
    tpu.vector_store %arg6[%c0_156, %c352], %99 {strides = array<i32>} : memref<2x384xf32, #tpu.memory_space<vmem>>, vector<2x11xf32>,
    %c0_157 = arith.constant 0 : index
    %c0_158 = arith.constant 0 : index
    %101 = vector.load %arg6[%c0_157, %c0_158] : memref<2x384xf32, #tpu.memory_space<vmem>>, vector<2x384xf32>
    %102 = arith.truncf %101 : vector<2x384xf32> to vector<2x384xbf16>
    %c0_159 = arith.constant 0 : index
    %c0_160 = arith.constant 0 : index
    %103 = vector.load %arg2[%c0_159, %c0_160] : memref<384x1296xbf16, #tpu.memory_space<vmem>>, vector<384x1296xbf16>
    %cst_161 = arith.constant dense<0.000000e+00> : vector<2x1296xf32>
    %104 = tpu.matmul %102, %103, %cst_161 {dimension_numbers = #tpu.dot_dimension_numbers<[1], [0], [0], [1], [0, 0, 1, 1], [], []>} : vector<2x384xbf16>, vector<384x1296xbf16>, vector<2x1296xf32> -> vector<2x1296xf32>
    %c0_162 = arith.constant 0 : index
    %c0_163 = arith.constant 0 : index
    %105 = vector.load %arg7[%c0_162, %c0_163] : memref<2x1296xf32, #tpu.memory_space<vmem>>, vector<2x1296xf32>
    tpu.vector_store %arg7[%c0_162, %c0_163], %104 {strides = array<i32>} : memref<2x1296xf32, #tpu.memory_space<vmem>>, vector<2x1296xf32>,
    %c0_164 = arith.constant 0 : index
    %c0_165 = arith.constant 0 : index
    %106 = vector.load %arg7[%c0_164, %c0_165] : memref<2x1296xf32, #tpu.memory_space<vmem>>, vector<2x1008xf32>
    %c0_166 = arith.constant 0 : index
    %c144 = arith.constant 144 : index
    %107 = vector.load %arg7[%c0_166, %c144] : memref<2x1296xf32, #tpu.memory_space<vmem>>, vector<2x1008xf32>
    %108 = arith.maximumf %106, %107 : vector<2x1008xf32>
    %c0_167 = arith.constant 0 : index
    %c288 = arith.constant 288 : index
    %109 = vector.load %arg7[%c0_167, %c288] : memref<2x1296xf32, #tpu.memory_space<vmem>>, vector<2x1008xf32>
    %110 = arith.maximumf %108, %109 : vector<2x1008xf32>
    %111 = vector.extract_strided_slice %110 {offsets = [0, 0], sizes = [2, 976], strides = [1, 1]} : vector<2x1008xf32> to vector<2x976xf32>
    %112 = vector.extract_strided_slice %110 {offsets = [0, 16], sizes = [2, 976], strides = [1, 1]} : vector<2x1008xf32> to vector<2x976xf32>
    %113 = arith.maximumf %111, %112 : vector<2x976xf32>
    %114 = vector.extract_strided_slice %110 {offsets = [0, 32], sizes = [2, 976], strides = [1, 1]} : vector<2x1008xf32> to vector<2x976xf32>
    %115 = arith.maximumf %113, %114 : vector<2x976xf32>
    %116 = vector.extract_strided_slice %115 {offsets = [0, 0], sizes = [2, 16], strides = [1, 1]} : vector<2x976xf32> to vector<2x16xf32>
    %c0_168 = arith.constant 0 : index
    %c0_169 = arith.constant 0 : index
    %117 = vector.load %arg8[%c0_168, %c0_169] : memref<2x256xf32, #tpu.memory_space<vmem>>, vector<2x16xf32>
    tpu.vector_store %arg8[%c0_168, %c0_169], %116 {strides = array<i32>} : memref<2x256xf32, #tpu.memory_space<vmem>>, vector<2x16xf32>,
    %118 = vector.extract_strided_slice %115 {offsets = [0, 32], sizes = [2, 16], strides = [1, 1]} : vector<2x976xf32> to vector<2x16xf32>
    %c0_170 = arith.constant 0 : index
    %c16 = arith.constant 16 : index
    %119 = vector.load %arg8[%c0_170, %c16] : memref<2x256xf32, #tpu.memory_space<vmem>>, vector<2x16xf32>
    tpu.vector_store %arg8[%c0_170, %c16], %118 {strides = array<i32>} : memref<2x256xf32, #tpu.memory_space<vmem>>, vector<2x16xf32>,
    %120 = vector.extract_strided_slice %115 {offsets = [0, 64], sizes = [2, 16], strides = [1, 1]} : vector<2x976xf32> to vector<2x16xf32>
    %c0_171 = arith.constant 0 : index
    %c32 = arith.constant 32 : index
    %121 = vector.load %arg8[%c0_171, %c32] : memref<2x256xf32, #tpu.memory_space<vmem>>, vector<2x16xf32>
    tpu.vector_store %arg8[%c0_171, %c32], %120 {strides = array<i32>} : memref<2x256xf32, #tpu.memory_space<vmem>>, vector<2x16xf32>,
    %122 = vector.extract_strided_slice %115 {offsets = [0, 96], sizes = [2, 16], strides = [1, 1]} : vector<2x976xf32> to vector<2x16xf32>
    %c0_172 = arith.constant 0 : index
    %c48 = arith.constant 48 : index
    %123 = vector.load %arg8[%c0_172, %c48] : memref<2x256xf32, #tpu.memory_space<vmem>>, vector<2x16xf32>
    tpu.vector_store %arg8[%c0_172, %c48], %122 {strides = array<i32>} : memref<2x256xf32, #tpu.memory_space<vmem>>, vector<2x16xf32>,
    %124 = vector.extract_strided_slice %115 {offsets = [0, 288], sizes = [2, 16], strides = [1, 1]} : vector<2x976xf32> to vector<2x16xf32>
    %c0_173 = arith.constant 0 : index
    %c64 = arith.constant 64 : index
    %125 = vector.load %arg8[%c0_173, %c64] : memref<2x256xf32, #tpu.memory_space<vmem>>, vector<2x16xf32>
    tpu.vector_store %arg8[%c0_173, %c64], %124 {strides = array<i32>} : memref<2x256xf32, #tpu.memory_space<vmem>>, vector<2x16xf32>,
    %126 = vector.extract_strided_slice %115 {offsets = [0, 320], sizes = [2, 16], strides = [1, 1]} : vector<2x976xf32> to vector<2x16xf32>
    %c0_174 = arith.constant 0 : index
    %c80 = arith.constant 80 : index
    %127 = vector.load %arg8[%c0_174, %c80] : memref<2x256xf32, #tpu.memory_space<vmem>>, vector<2x16xf32>
    tpu.vector_store %arg8[%c0_174, %c80], %126 {strides = array<i32>} : memref<2x256xf32, #tpu.memory_space<vmem>>, vector<2x16xf32>,
    %128 = vector.extract_strided_slice %115 {offsets = [0, 352], sizes = [2, 16], strides = [1, 1]} : vector<2x976xf32> to vector<2x16xf32>
    %c0_175 = arith.constant 0 : index
    %c96 = arith.constant 96 : index
    %129 = vector.load %arg8[%c0_175, %c96] : memref<2x256xf32, #tpu.memory_space<vmem>>, vector<2x16xf32>
    tpu.vector_store %arg8[%c0_175, %c96], %128 {strides = array<i32>} : memref<2x256xf32, #tpu.memory_space<vmem>>, vector<2x16xf32>,
    %130 = vector.extract_strided_slice %115 {offsets = [0, 384], sizes = [2, 16], strides = [1, 1]} : vector<2x976xf32> to vector<2x16xf32>
    %c0_176 = arith.constant 0 : index
    %c112 = arith.constant 112 : index
    %131 = vector.load %arg8[%c0_176, %c112] : memref<2x256xf32, #tpu.memory_space<vmem>>, vector<2x16xf32>
    tpu.vector_store %arg8[%c0_176, %c112], %130 {strides = array<i32>} : memref<2x256xf32, #tpu.memory_space<vmem>>, vector<2x16xf32>,
    %132 = vector.extract_strided_slice %115 {offsets = [0, 576], sizes = [2, 16], strides = [1, 1]} : vector<2x976xf32> to vector<2x16xf32>
    %c0_177 = arith.constant 0 : index
    %c128 = arith.constant 128 : index
    %133 = vector.load %arg8[%c0_177, %c128] : memref<2x256xf32, #tpu.memory_space<vmem>>, vector<2x16xf32>
    tpu.vector_store %arg8[%c0_177, %c128], %132 {strides = array<i32>} : memref<2x256xf32, #tpu.memory_space<vmem>>, vector<2x16xf32>,
    %134 = vector.extract_strided_slice %115 {offsets = [0, 608], sizes = [2, 16], strides = [1, 1]} : vector<2x976xf32> to vector<2x16xf32>
    %c0_178 = arith.constant 0 : index
    %c144_179 = arith.constant 144 : index
    %135 = vector.load %arg8[%c0_178, %c144_179] : memref<2x256xf32, #tpu.memory_space<vmem>>, vector<2x16xf32>
    tpu.vector_store %arg8[%c0_178, %c144_179], %134 {strides = array<i32>} : memref<2x256xf32, #tpu.memory_space<vmem>>, vector<2x16xf32>,
    %136 = vector.extract_strided_slice %115 {offsets = [0, 640], sizes = [2, 16], strides = [1, 1]} : vector<2x976xf32> to vector<2x16xf32>
    %c0_180 = arith.constant 0 : index
    %c160 = arith.constant 160 : index
    %137 = vector.load %arg8[%c0_180, %c160] : memref<2x256xf32, #tpu.memory_space<vmem>>, vector<2x16xf32>
    tpu.vector_store %arg8[%c0_180, %c160], %136 {strides = array<i32>} : memref<2x256xf32, #tpu.memory_space<vmem>>, vector<2x16xf32>,
    %138 = vector.extract_strided_slice %115 {offsets = [0, 672], sizes = [2, 16], strides = [1, 1]} : vector<2x976xf32> to vector<2x16xf32>
    %c0_181 = arith.constant 0 : index
    %c176_182 = arith.constant 176 : index
    %139 = vector.load %arg8[%c0_181, %c176_182] : memref<2x256xf32, #tpu.memory_space<vmem>>, vector<2x16xf32>
    tpu.vector_store %arg8[%c0_181, %c176_182], %138 {strides = array<i32>} : memref<2x256xf32, #tpu.memory_space<vmem>>, vector<2x16xf32>,
    %140 = vector.extract_strided_slice %115 {offsets = [0, 864], sizes = [2, 16], strides = [1, 1]} : vector<2x976xf32> to vector<2x16xf32>
    %c0_183 = arith.constant 0 : index
    %c192 = arith.constant 192 : index
    %141 = vector.load %arg8[%c0_183, %c192] : memref<2x256xf32, #tpu.memory_space<vmem>>, vector<2x16xf32>
    tpu.vector_store %arg8[%c0_183, %c192], %140 {strides = array<i32>} : memref<2x256xf32, #tpu.memory_space<vmem>>, vector<2x16xf32>,
    %142 = vector.extract_strided_slice %115 {offsets = [0, 896], sizes = [2, 16], strides = [1, 1]} : vector<2x976xf32> to vector<2x16xf32>
    %c0_184 = arith.constant 0 : index
    %c208 = arith.constant 208 : index
    %143 = vector.load %arg8[%c0_184, %c208] : memref<2x256xf32, #tpu.memory_space<vmem>>, vector<2x16xf32>
    tpu.vector_store %arg8[%c0_184, %c208], %142 {strides = array<i32>} : memref<2x256xf32, #tpu.memory_space<vmem>>, vector<2x16xf32>,
    %144 = vector.extract_strided_slice %115 {offsets = [0, 928], sizes = [2, 16], strides = [1, 1]} : vector<2x976xf32> to vector<2x16xf32>
    %c0_185 = arith.constant 0 : index
    %c224 = arith.constant 224 : index
    %145 = vector.load %arg8[%c0_185, %c224] : memref<2x256xf32, #tpu.memory_space<vmem>>, vector<2x16xf32>
    tpu.vector_store %arg8[%c0_185, %c224], %144 {strides = array<i32>} : memref<2x256xf32, #tpu.memory_space<vmem>>, vector<2x16xf32>,
    %146 = vector.extract_strided_slice %115 {offsets = [0, 960], sizes = [2, 16], strides = [1, 1]} : vector<2x976xf32> to vector<2x16xf32>
    %c0_186 = arith.constant 0 : index
    %c240 = arith.constant 240 : index
    %147 = vector.load %arg8[%c0_186, %c240] : memref<2x256xf32, #tpu.memory_space<vmem>>, vector<2x16xf32>
    tpu.vector_store %arg8[%c0_186, %c240], %146 {strides = array<i32>} : memref<2x256xf32, #tpu.memory_space<vmem>>, vector<2x16xf32>,
    %c0_187 = arith.constant 0 : index
    %c0_188 = arith.constant 0 : index
    %148 = vector.load %arg8[%c0_187, %c0_188] : memref<2x256xf32, #tpu.memory_space<vmem>>, vector<2x256xf32>
    %149 = arith.truncf %148 : vector<2x256xf32> to vector<2x256xbf16>
    %c0_189 = arith.constant 0 : index
    %c0_190 = arith.constant 0 : index
    %150 = vector.load %arg3[%c0_189, %c0_190] : memref<256x128xbf16, #tpu.memory_space<vmem>>, vector<256x128xbf16>
    %cst_191 = arith.constant dense<0.000000e+00> : vector<2x128xf32>
    %151 = tpu.matmul %149, %150, %cst_191 {dimension_numbers = #tpu.dot_dimension_numbers<[1], [0], [0], [1], [0, 0, 1, 1], [], []>} : vector<2x256xbf16>, vector<256x128xbf16>, vector<2x128xf32> -> vector<2x128xf32>
    %c0_192 = arith.constant 0 : index
    %c0_193 = arith.constant 0 : index
    %152 = vector.load %arg4[%c0_192, %c0_193] : memref<1x128xf32, #tpu.memory_space<vmem>>, vector<1x128xf32>
    %153 = vector.broadcast %152 : vector<1x128xf32> to vector<2x128xf32>
    %154 = arith.addf %151, %153 : vector<2x128xf32>
    %c0_194 = arith.constant 0 : index
    %c0_195 = arith.constant 0 : index
    %155 = vector.load %arg5[%c0_194, %c0_195] : memref<2x128xf32, #tpu.memory_space<vmem>>, vector<2x128xf32>
    tpu.vector_store %arg5[%c0_194, %c0_195], %154 {strides = array<i32>} : memref<2x128xf32, #tpu.memory_space<vmem>>, vector<2x128xf32>,
    return
  }
  func.func @transform_0(%arg0: i32) -> (i32, i32, i32, i32) {
    %c0_i32 = arith.constant 0 : i32
    %c0_i32_0 = arith.constant 0 : i32
    %c0_i32_1 = arith.constant 0 : i32
    %c0_i32_2 = arith.constant 0 : i32
    return %arg0, %c0_i32, %c0_i32_0, %c0_i32_1 : i32, i32, i32, i32
  }
  func.func @transform_1(%arg0: i32) -> (i32, i32) {
    %c0_i32 = arith.constant 0 : i32
    %c0_i32_0 = arith.constant 0 : i32
    %c0_i32_1 = arith.constant 0 : i32
    return %c0_i32, %c0_i32_0 : i32, i32
  }
  func.func @transform_2(%arg0: i32) -> (i32, i32) {
    %c0_i32 = arith.constant 0 : i32
    %c0_i32_0 = arith.constant 0 : i32
    %c0_i32_1 = arith.constant 0 : i32
    return %c0_i32, %c0_i32_0 : i32, i32
  }
  func.func @transform_3(%arg0: i32) -> (i32, i32) {
    %c0_i32 = arith.constant 0 : i32
    %c0_i32_0 = arith.constant 0 : i32
    %c0_i32_1 = arith.constant 0 : i32
    return %c0_i32, %c0_i32_0 : i32, i32
  }
  func.func @transform_4(%arg0: i32) -> (i32, i32) {
    %c0_i32 = arith.constant 0 : i32
    %c0_i32_0 = arith.constant 0 : i32
    return %arg0, %c0_i32 : i32, i32
  }
}

</mosaic_0001>

<llo_original>
// kernel: net12_forward.1
$region0: #{net12_forward.1}
  #allocation0 [shape = 'u32[]', space=smem, size = 0x4, offset = 0x4, fixed_abs, tag = 'smem constant byte address 0x4 - core index']
  #allocation1 [shape = 'u32[72,128]{1,0:T(1,128)}', space=vmem, size = 0x9000, scoped, tag = 'internal scratch']
  #allocation2 [shape = 'f32[2,384]{1,0:T(2,128)}', space=vmem, size = 0xc00, scoped, tag = 'scratch operand']
  #allocation3 [shape = 'f32[2,1296]{1,0:T(2,128)}', space=vmem, size = 0x2c00, scoped, tag = 'scratch operand']
  #allocation4 [shape = 'f32[2,256]{1,0:T(2,128)}', space=vmem, size = 0x800, scoped, tag = 'scratch operand']
  %s0 = inlined_call_operand.vmem [shape: f32[2,3,11,11], index: 0, kind: input, shape index: {}]
  %s1 = inlined_call_operand.vmem [shape: bf16[384,1296], index: 1, kind: input, shape index: {}]
  %s2 = inlined_call_operand.vmem [shape: bf16[256,128], index: 2, kind: input, shape index: {}]
  %s3 = inlined_call_operand.vmem [shape: f32[1,128], index: 3, kind: input, shape index: {}]
  %s4 = inlined_call_operand.hbm [shape: f32[2,128], index: 4, kind: output, shape index: {}]
  %s5 = sld [smem:[#allocation0]]
  $region26: #{net12_forward.1} parent=0
    _
  %s7 = ssub.s32 1, %s5
  %s8 = scalar_select 0, %s7, %s5
  $region1: #{net12_forward.1} parent=0
    #allocation5 [shape = 'u8[1024]{0}', space=vmem, size = 0x400, scoped, tag = 'output window, operand 0, single buffered']
    #allocation6 [shape = 's32[1]{0}', space=sflag, size = 0x4, scoped, tag = 'scoped memory for net12_forward.1']
    %9 = vsyncpa [#allocation6], 0
    // Predicated region
    $region2: #{net12_forward.1} parent=1 // pred_check
      _
    $region3: #{net12_forward.1} parent=1 // pred_check_branch
      %11 = sbr.rel (0) target = $region5
    $region4: #{net12_forward.1} parent=1 // pred_region
      _
    $region5: #{net12_forward.1} parent=1 // pred_fallthru
      _
    // Predicated region
    $region6: #{net12_forward.1} parent=1 // pred_check
      _
    $region7: #{net12_forward.1} parent=1 // pred_check_branch
      %13 = sbr.rel (0) target = $region9
    $region8: #{net12_forward.1} parent=1 // pred_region
      _
    $region9: #{net12_forward.1} parent=1 // pred_fallthru
      _
    // Predicated region
    $region10: #{net12_forward.1} parent=1 // pred_check
      _
    $region11: #{net12_forward.1} parent=1 // pred_check_branch
      %15 = sbr.rel (0) target = $region13
    $region12: #{net12_forward.1} parent=1 // pred_region
      _
    $region13: #{net12_forward.1} parent=1 // pred_fallthru
      _
    // Predicated region
    $region14: #{net12_forward.1} parent=1 // pred_check
      _
    $region15: #{net12_forward.1} parent=1 // pred_check_branch
      %17 = sbr.rel (0) target = $region17
    $region16: #{net12_forward.1} parent=1 // pred_region
      _
    $region17: #{net12_forward.1} parent=1 // pred_fallthru
      _
    %18 = vst [vmem:[#allocation2] sm:$0x3f] 0.0
    %v19 = vld [vmem:[%s0] sm:$0x1]
    %v20 = vld [vmem:[%s0 + $0x30] sm:$0x1]
    %vm23 = vcmask 1044484
    %v24 = vsel %vm23, %v19, %v19
    %vm25 = vcmask 1046534
    %v26 = vsel %vm25, %v19, %v24
    %v27 = vrot.slane %v20, 7
    %vm28 = vcmask 1041409
    %v29 = vsel %vm28, %v27, %v26
    %vm30 = vcmask 1043459
    %v31 = vsel %vm30, %v27, %v29
    %vm32 = vcmask 1045509
    %v33 = vsel %vm32, %v27, %v31
    %vm34 = vcmask 1047559
    %v35 = vsel %vm34, %v27, %v33
    %vm37 = vcmask 82944
    %38 = vst.msk [vmem:[#allocation2] sm:$0x3] %vm37, %v35
    %v39 = vld [vmem:[%s0 + $0x1] sm:$0x1]
    %v40 = vld [vmem:[%s0 + $0x31] sm:$0x1]
    %v43 = vsel %vm23, %v39, %v39
    %v44 = vsel %vm25, %v39, %v43
    %v45 = vrot.slane %v40, 7
    %v46 = vsel %vm28, %v45, %v44
    %v47 = vsel %vm30, %v45, %v46
    %v48 = vsel %vm32, %v45, %v47
    %v49 = vsel %vm34, %v45, %v48
    %50 = vrot.lane.b32.xlu0 %v49, 33
    %v51 = vpop.permute.xlu0 %50
    %vm53 = vcmask 353544
    %54 = vst.msk [vmem:[#allocation2] sm:$0x3] %vm53, %v51
    %v55 = vld [vmem:[%s0 + $0x2] sm:$0x1]
    %v56 = vld [vmem:[%s0 + $0x32] sm:$0x1]
    %v59 = vsel %vm23, %v55, %v55
    %v60 = vsel %vm25, %v55, %v59
    %v61 = vrot.slane %v56, 7
    %v62 = vsel %vm28, %v61, %v60
    %v63 = vsel %vm30, %v61, %v62
    %v64 = vsel %vm32, %v61, %v63
    %v65 = vsel %vm34, %v61, %v64
    %66 = vrot.lane.b32.xlu0 %v65, 66
    %v67 = vpop.permute.xlu0 %66
    %vm69 = vcmask 624144
    %70 = vst.msk [vmem:[#allocation2] sm:$0x3] %vm69, %v67
    %v71 = vld [vmem:[%s0 + $0x3] sm:$0x1]
    %v72 = vld [vmem:[%s0 + $0x33] sm:$0x1]
    %v75 = vsel %vm23, %v71, %v71
    %v76 = vsel %vm25, %v71, %v75
    %v77 = vrot.slane %v72, 7
    %v78 = vsel %vm28, %v77, %v76
    %v79 = vsel %vm30, %v77, %v78
    %v80 = vsel %vm32, %v77, %v79
    %v81 = vsel %vm34, %v77, %v80
    %82 = vrot.lane.b32.xlu0 %v81, 99
    %v83 = vpop.permute.xlu0 %82
    %vm85 = vcmask 894744
    %86 = vst.msk [vmem:[#allocation2] sm:$0x3] %vm85, %v83
    %v87 = vld [vmem:[%s0 + $0x4] sm:$0x1]
    %v88 = vld [vmem:[%s0 + $0x34] sm:$0x1]
    %v91 = vsel %vm23, %v87, %v87
    %v92 = vsel %vm25, %v87, %v91
    %v93 = vrot.slane %v88, 7
    %v94 = vsel %vm28, %v93, %v92
    %v95 = vsel %vm30, %v93, %v94
    %v96 = vsel %vm32, %v93, %v95
    %v97 = vsel %vm34, %v93, %v96
    %98 = vrot.lane.b32.xlu0 %v97, 4
    %v99 = vpop.permute.xlu0 %98
    %vm101 = vcmask 115744
    %102 = vst.msk [vmem:[#allocation2 + $0x2] sm:$0x3] %vm101, %v99
    %v103 = vld [vmem:[%s0 + $0x5] sm:$0x1]
    %v104 = vld [vmem:[%s0 + $0x35] sm:$0x1]
    %v107 = vsel %vm23, %v103, %v103
    %v108 = vsel %vm25, %v103, %v107
    %v109 = vrot.slane %v104, 7
    %v110 = vsel %vm28, %v109, %v108
    %v111 = vsel %vm30, %v109, %v110
    %v112 = vsel %vm32, %v109, %v111
    %v113 = vsel %vm34, %v109, %v112
    %114 = vrot.lane.b32.xlu0 %v113, 37
    %v115 = vpop.permute.xlu0 %114
    %vm117 = vcmask 386344
    %118 = vst.msk [vmem:[#allocation2 + $0x2] sm:$0x3] %vm117, %v115
    %v119 = vld [vmem:[%s0 + $0x6] sm:$0x1]
    %v120 = vld [vmem:[%s0 + $0x36] sm:$0x1]
    %v123 = vsel %vm23, %v119, %v119
    %v124 = vsel %vm25, %v119, %v123
    %v125 = vrot.slane %v120, 7
    %v126 = vsel %vm28, %v125, %v124
    %v127 = vsel %vm30, %v125, %v126
    %v128 = vsel %vm32, %v125, %v127
    %v129 = vsel %vm34, %v125, %v128
    %130 = vrot.lane.b32.xlu0 %v129, 70
    %v131 = vpop.permute.xlu0 %130
    %vm133 = vcmask 656944
    %134 = vst.msk [vmem:[#allocation2 + $0x2] sm:$0x3] %vm133, %v131
    %v135 = vld [vmem:[%s0 + $0x7] sm:$0x1]
    %v136 = vld [vmem:[%s0 + $0x37] sm:$0x1]
    %v139 = vsel %vm23, %v135, %v135
    %v140 = vsel %vm25, %v135, %v139
    %v141 = vrot.slane %v136, 7
    %v142 = vsel %vm28, %v141, %v140
    %v143 = vsel %vm30, %v141, %v142
    %v144 = vsel %vm32, %v141, %v143
    %v145 = vsel %vm34, %v141, %v144
    %146 = vrot.lane.b32.xlu0 %v145, 103
    %v147 = vpop.permute.xlu0 %146
    %vm149 = vcmask 927544
    %150 = vst.msk [vmem:[#allocation2 + $0x2] sm:$0x3] %vm149, %v147
    %v151 = vld [vmem:[%s0 + $0x8] sm:$0x1]
    %v152 = vld [vmem:[%s0 + $0x38] sm:$0x1]
    %v155 = vsel %vm23, %v151, %v151
    %v156 = vsel %vm25, %v151, %v155
    %v157 = vrot.slane %v152, 7
    %v158 = vsel %vm28, %v157, %v156
    %v159 = vsel %vm30, %v157, %v158
    %v160 = vsel %vm32, %v157, %v159
    %v161 = vsel %vm34, %v157, %v160
    %162 = vrot.lane.b32.xlu0 %v161, 8
    %v163 = vpop.permute.xlu0 %162
    %vm165 = vcmask 148544
    %166 = vst.msk [vmem:[#allocation2 + $0x4] sm:$0x3] %vm165, %v163
    %v167 = vld [vmem:[%s0 + $0x9] sm:$0x1]
    %v168 = vld [vmem:[%s0 + $0x39] sm:$0x1]
    %v171 = vsel %vm23, %v167, %v167
    %v172 = vsel %vm25, %v167, %v171
    %v173 = vrot.slane %v168, 7
    %v174 = vsel %vm28, %v173, %v172
    %v175 = vsel %vm30, %v173, %v174
    %v176 = vsel %vm32, %v173, %v175
    %v177 = vsel %vm34, %v173, %v176
    %178 = vrot.lane.b32.xlu0 %v177, 41
    %v179 = vpop.permute.xlu0 %178
    %vm181 = vcmask 419144
    %182 = vst.msk [vmem:[#allocation2 + $0x4] sm:$0x3] %vm181, %v179
    %v183 = vld [vmem:[%s0 + $0xa] sm:$0x1]
    %v184 = vld [vmem:[%s0 + $0x3a] sm:$0x1]
    %v187 = vsel %vm23, %v183, %v183
    %v188 = vsel %vm25, %v183, %v187
    %v189 = vrot.slane %v184, 7
    %v190 = vsel %vm28, %v189, %v188
    %v191 = vsel %vm30, %v189, %v190
    %v192 = vsel %vm32, %v189, %v191
    %v193 = vsel %vm34, %v189, %v192
    %194 = vrot.lane.b32.xlu0 %v193, 74
    %v195 = vpop.permute.xlu0 %194
    %vm197 = vcmask 689744
    %198 = vst.msk [vmem:[#allocation2 + $0x4] sm:$0x3] %vm197, %v195
    %s199 = scalar_lea.vmem %s0, 16
    %v200 = vld [vmem:[%s199] sm:$0x1]
    %v201 = vld [vmem:[%s199 + $0x30] sm:$0x1]
    %v204 = vsel %vm23, %v200, %v200
    %v205 = vsel %vm25, %v200, %v204
    %v206 = vrot.slane %v201, 7
    %v207 = vsel %vm28, %v206, %v205
    %v208 = vsel %vm30, %v206, %v207
    %v209 = vsel %vm32, %v206, %v208
    %v210 = vsel %vm34, %v206, %v209
    %211 = vrot.lane.b32.xlu0 %v210, 11
    %v212 = vpop.permute.xlu0 %211
    %vm214 = vcmask 173144
    %215 = vst.msk [vmem:[#allocation2] sm:$0x3] %vm214, %v212
    %v216 = vld [vmem:[%s199 + $0x1] sm:$0x1]
    %v217 = vld [vmem:[%s199 + $0x31] sm:$0x1]
    %v220 = vsel %vm23, %v216, %v216
    %v221 = vsel %vm25, %v216, %v220
    %v222 = vrot.slane %v217, 7
    %v223 = vsel %vm28, %v222, %v221
    %v224 = vsel %vm30, %v222, %v223
    %v225 = vsel %vm32, %v222, %v224
    %v226 = vsel %vm34, %v222, %v225
    %227 = vrot.lane.b32.xlu0 %v226, 44
    %v228 = vpop.permute.xlu0 %227
    %vm230 = vcmask 443744
    %231 = vst.msk [vmem:[#allocation2] sm:$0x3] %vm230, %v228
    %v232 = vld [vmem:[%s199 + $0x2] sm:$0x1]
    %v233 = vld [vmem:[%s199 + $0x32] sm:$0x1]
    %v236 = vsel %vm23, %v232, %v232
    %v237 = vsel %vm25, %v232, %v236
    %v238 = vrot.slane %v233, 7
    %v239 = vsel %vm28, %v238, %v237
    %v240 = vsel %vm30, %v238, %v239
    %v241 = vsel %vm32, %v238, %v240
    %v242 = vsel %vm34, %v238, %v241
    %243 = vrot.lane.b32.xlu0 %v242, 77
    %v244 = vpop.permute.xlu0 %243
    %vm246 = vcmask 714344
    %247 = vst.msk [vmem:[#allocation2] sm:$0x3] %vm246, %v244
    %v248 = vld [vmem:[%s199 + $0x3] sm:$0x1]
    %v249 = vld [vmem:[%s199 + $0x33] sm:$0x1]
    %v252 = vsel %vm23, %v248, %v248
    %v253 = vsel %vm25, %v248, %v252
    %v254 = vrot.slane %v249, 7
    %v255 = vsel %vm28, %v254, %v253
    %v256 = vsel %vm30, %v254, %v255
    %v257 = vsel %vm32, %v254, %v256
    %v258 = vsel %vm34, %v254, %v257
    %259 = vrot.lane.b32.xlu0 %v258, 110
    %v260 = vpop.permute.xlu0 %259
    %vm262 = vcmask 984944
    %263 = vst.msk [vmem:[#allocation2] sm:$0x3] %vm262, %v260
    %v264 = vld [vmem:[%s199 + $0x4] sm:$0x1]
    %v265 = vld [vmem:[%s199 + $0x34] sm:$0x1]
    %v268 = vsel %vm23, %v264, %v264
    %v269 = vsel %vm25, %v264, %v268
    %v270 = vrot.slane %v265, 7
    %v271 = vsel %vm28, %v270, %v269
    %v272 = vsel %vm30, %v270, %v271
    %v273 = vsel %vm32, %v270, %v272
    %v274 = vsel %vm34, %v270, %v273
    %275 = vrot.lane.b32.xlu0 %v274, 15
    %v276 = vpop.permute.xlu0 %275
    %vm278 = vcmask 205944
    %279 = vst.msk [vmem:[#allocation2 + $0x2] sm:$0x3] %vm278, %v276
    %v280 = vld [vmem:[%s199 + $0x5] sm:$0x1]
    %v281 = vld [vmem:[%s199 + $0x35] sm:$0x1]
    %v284 = vsel %vm23, %v280, %v280
    %v285 = vsel %vm25, %v280, %v284
    %v286 = vrot.slane %v281, 7
    %v287 = vsel %vm28, %v286, %v285
    %v288 = vsel %vm30, %v286, %v287
    %v289 = vsel %vm32, %v286, %v288
    %v290 = vsel %vm34, %v286, %v289
    %291 = vrot.lane.b32.xlu0 %v290, 48
    %v292 = vpop.permute.xlu0 %291
    %vm294 = vcmask 476544
    %295 = vst.msk [vmem:[#allocation2 + $0x2] sm:$0x3] %vm294, %v292
    %v296 = vld [vmem:[%s199 + $0x6] sm:$0x1]
    %v297 = vld [vmem:[%s199 + $0x36] sm:$0x1]
    %v300 = vsel %vm23, %v296, %v296
    %v301 = vsel %vm25, %v296, %v300
    %v302 = vrot.slane %v297, 7
    %v303 = vsel %vm28, %v302, %v301
    %v304 = vsel %vm30, %v302, %v303
    %v305 = vsel %vm32, %v302, %v304
    %v306 = vsel %vm34, %v302, %v305
    %307 = vrot.lane.b32.xlu0 %v306, 81
    %v308 = vpop.permute.xlu0 %307
    %vm310 = vcmask 747144
    %311 = vst.msk [vmem:[#allocation2 + $0x2] sm:$0x3] %vm310, %v308
    %v312 = vld [vmem:[%s199 + $0x7] sm:$0x1]
    %v313 = vld [vmem:[%s199 + $0x37] sm:$0x1]
    %v316 = vsel %vm23, %v312, %v312
    %v317 = vsel %vm25, %v312, %v316
    %v318 = vrot.slane %v313, 7
    %v319 = vsel %vm28, %v318, %v317
    %v320 = vsel %vm30, %v318, %v319
    %v321 = vsel %vm32, %v318, %v320
    %v322 = vsel %vm34, %v318, %v321
    %323 = vrot.lane.b32.xlu0 %v322, 114
    %v324 = vpop.permute.xlu0 %323
    %vm326 = vcmask 1017744
    %327 = vst.msk [vmem:[#allocation2 + $0x2] sm:$0x3] %vm326, %v324
    %v328 = vld [vmem:[%s199 + $0x8] sm:$0x1]
    %v329 = vld [vmem:[%s199 + $0x38] sm:$0x1]
    %v332 = vsel %vm23, %v328, %v328
    %v333 = vsel %vm25, %v328, %v332
    %v334 = vrot.slane %v329, 7
    %v335 = vsel %vm28, %v334, %v333
    %v336 = vsel %vm30, %v334, %v335
    %v337 = vsel %vm32, %v334, %v336
    %v338 = vsel %vm34, %v334, %v337
    %339 = vrot.lane.b32.xlu0 %v338, 19
    %v340 = vpop.permute.xlu0 %339
    %vm342 = vcmask 238744
    %343 = vst.msk [vmem:[#allocation2 + $0x4] sm:$0x3] %vm342, %v340
    %v344 = vld [vmem:[%s199 + $0x9] sm:$0x1]
    %v345 = vld [vmem:[%s199 + $0x39] sm:$0x1]
    %v348 = vsel %vm23, %v344, %v344
    %v349 = vsel %vm25, %v344, %v348
    %v350 = vrot.slane %v345, 7
    %v351 = vsel %vm28, %v350, %v349
    %v352 = vsel %vm30, %v350, %v351
    %v353 = vsel %vm32, %v350, %v352
    %v354 = vsel %vm34, %v350, %v353
    %355 = vrot.lane.b32.xlu0 %v354, 52
    %v356 = vpop.permute.xlu0 %355
    %vm358 = vcmask 509344
    %359 = vst.msk [vmem:[#allocation2 + $0x4] sm:$0x3] %vm358, %v356
    %v360 = vld [vmem:[%s199 + $0xa] sm:$0x1]
    %v361 = vld [vmem:[%s199 + $0x3a] sm:$0x1]
    %v364 = vsel %vm23, %v360, %v360
    %v365 = vsel %vm25, %v360, %v364
    %v366 = vrot.slane %v361, 7
    %v367 = vsel %vm28, %v366, %v365
    %v368 = vsel %vm30, %v366, %v367
    %v369 = vsel %vm32, %v366, %v368
    %v370 = vsel %vm34, %v366, %v369
    %371 = vrot.lane.b32.xlu0 %v370, 85
    %v372 = vpop.permute.xlu0 %371
    %vm374 = vcmask 779944
    %375 = vst.msk [vmem:[#allocation2 + $0x4] sm:$0x3] %vm374, %v372
    %s376 = scalar_lea.vmem %s0, 32
    %v377 = vld [vmem:[%s376] sm:$0x1]
    %v378 = vld [vmem:[%s376 + $0x30] sm:$0x1]
    %v381 = vsel %vm23, %v377, %v377
    %v382 = vsel %vm25, %v377, %v381
    %v383 = vrot.slane %v378, 7
    %v384 = vsel %vm28, %v383, %v382
    %v385 = vsel %vm30, %v383, %v384
    %v386 = vsel %vm32, %v383, %v385
    %v387 = vsel %vm34, %v383, %v386
    %388 = vrot.lane.b32.xlu0 %v387, 22
    %v389 = vpop.permute.xlu0 %388
    %vm391 = vcmask 263344
    %392 = vst.msk [vmem:[#allocation2] sm:$0x3] %vm391, %v389
    %v393 = vld [vmem:[%s376 + $0x1] sm:$0x1]
    %v394 = vld [vmem:[%s376 + $0x31] sm:$0x1]
    %v397 = vsel %vm23, %v393, %v393
    %v398 = vsel %vm25, %v393, %v397
    %v399 = vrot.slane %v394, 7
    %v400 = vsel %vm28, %v399, %v398
    %v401 = vsel %vm30, %v399, %v400
    %v402 = vsel %vm32, %v399, %v401
    %v403 = vsel %vm34, %v399, %v402
    %404 = vrot.lane.b32.xlu0 %v403, 55
    %v405 = vpop.permute.xlu0 %404
    %vm407 = vcmask 533944
    %408 = vst.msk [vmem:[#allocation2] sm:$0x3] %vm407, %v405
    %v409 = vld [vmem:[%s376 + $0x2] sm:$0x1]
    %v410 = vld [vmem:[%s376 + $0x32] sm:$0x1]
    %v413 = vsel %vm23, %v409, %v409
    %v414 = vsel %vm25, %v409, %v413
    %v415 = vrot.slane %v410, 7
    %v416 = vsel %vm28, %v415, %v414
    %v417 = vsel %vm30, %v415, %v416
    %v418 = vsel %vm32, %v415, %v417
    %v419 = vsel %vm34, %v415, %v418
    %420 = vrot.lane.b32.xlu0 %v419, 88
    %v421 = vpop.permute.xlu0 %420
    %vm423 = vcmask 804544
    %424 = vst.msk [vmem:[#allocation2] sm:$0x3] %vm423, %v421
    %v425 = vld [vmem:[%s376 + $0x3] sm:$0x1]
    %v426 = vld [vmem:[%s376 + $0x33] sm:$0x1]
    %v429 = vsel %vm23, %v425, %v425
    %v430 = vsel %vm25, %v425, %v429
    %v431 = vrot.slane %v426, 7
    %v432 = vsel %vm28, %v431, %v430
    %v433 = vsel %vm30, %v431, %v432
    %v434 = vsel %vm32, %v431, %v433
    %v435 = vsel %vm34, %v431, %v434
    %436 = vrot.lane.b32.xlu0 %v435, 121
    %v437 = vpop.permute.xlu0 %436
    %v438 = vrot.slane %v437, 6
    %vm439 = vcmask 990208
    %v440 = vsel %vm439, %v438, %v437
    %vm442 = vcmask 1042376
    %vm443 = vcmask 27650
    %vm444 = vmor %vm443, %vm442
    %445 = vst.msk [vmem:[#allocation2] sm:$0xf] %vm444, %v440
    %v446 = vld [vmem:[%s376 + $0x4] sm:$0x1]
    %v447 = vld [vmem:[%s376 + $0x34] sm:$0x1]
    %v450 = vsel %vm23, %v446, %v446
    %v451 = vsel %vm25, %v446, %v450
    %v452 = vrot.slane %v447, 7
    %v453 = vsel %vm28, %v452, %v451
    %v454 = vsel %vm30, %v452, %v453
    %v455 = vsel %vm32, %v452, %v454
    %v456 = vsel %vm34, %v452, %v455
    %457 = vrot.lane.b32.xlu0 %v456, 26
    %v458 = vpop.permute.xlu0 %457
    %vm460 = vcmask 296144
    %461 = vst.msk [vmem:[#allocation2 + $0x2] sm:$0x3] %vm460, %v458
    %v462 = vld [vmem:[%s376 + $0x5] sm:$0x1]
    %v463 = vld [vmem:[%s376 + $0x35] sm:$0x1]
    %v466 = vsel %vm23, %v462, %v462
    %v467 = vsel %vm25, %v462, %v466
    %v468 = vrot.slane %v463, 7
    %v469 = vsel %vm28, %v468, %v467
    %v470 = vsel %vm30, %v468, %v469
    %v471 = vsel %vm32, %v468, %v470
    %v472 = vsel %vm34, %v468, %v471
    %473 = vrot.lane.b32.xlu0 %v472, 59
    %v474 = vpop.permute.xlu0 %473
    %vm476 = vcmask 566744
    %477 = vst.msk [vmem:[#allocation2 + $0x2] sm:$0x3] %vm476, %v474
    %v478 = vld [vmem:[%s376 + $0x6] sm:$0x1]
    %v479 = vld [vmem:[%s376 + $0x36] sm:$0x1]
    %v482 = vsel %vm23, %v478, %v478
    %v483 = vsel %vm25, %v478, %v482
    %v484 = vrot.slane %v479, 7
    %v485 = vsel %vm28, %v484, %v483
    %v486 = vsel %vm30, %v484, %v485
    %v487 = vsel %vm32, %v484, %v486
    %v488 = vsel %vm34, %v484, %v487
    %489 = vrot.lane.b32.xlu0 %v488, 92
    %v490 = vpop.permute.xlu0 %489
    %vm492 = vcmask 837344
    %493 = vst.msk [vmem:[#allocation2 + $0x2] sm:$0x3] %vm492, %v490
    %v494 = vld [vmem:[%s376 + $0x7] sm:$0x1]
    %v495 = vld [vmem:[%s376 + $0x37] sm:$0x1]
    %v498 = vsel %vm23, %v494, %v494
    %v499 = vsel %vm25, %v494, %v498
    %v500 = vrot.slane %v495, 7
    %v501 = vsel %vm28, %v500, %v499
    %v502 = vsel %vm30, %v500, %v501
    %v503 = vsel %vm32, %v500, %v502
    %v504 = vsel %vm34, %v500, %v503
    %505 = vrot.lane.b32.xlu0 %v504, 125
    %v506 = vpop.permute.xlu0 %505
    %v507 = vrot.slane %v506, 6
    %vm508 = vcmask 1022976
    %v509 = vsel %vm508, %v507, %v506
    %vm511 = vcmask 1042408
    %vm512 = vcmask 60418
    %vm513 = vmor %vm512, %vm511
    %514 = vst.msk [vmem:[#allocation2 + $0x2] sm:$0xf] %vm513, %v509
    %v515 = vld [vmem:[%s376 + $0x8] sm:$0x1]
    %v516 = vld [vmem:[%s376 + $0x38] sm:$0x1]
    %v519 = vsel %vm23, %v515, %v515
    %v520 = vsel %vm25, %v515, %v519
    %v521 = vrot.slane %v516, 7
    %v522 = vsel %vm28, %v521, %v520
    %v523 = vsel %vm30, %v521, %v522
    %v524 = vsel %vm32, %v521, %v523
    %v525 = vsel %vm34, %v521, %v524
    %526 = vrot.lane.b32.xlu0 %v525, 30
    %v527 = vpop.permute.xlu0 %526
    %vm529 = vcmask 328944
    %530 = vst.msk [vmem:[#allocation2 + $0x4] sm:$0x3] %vm529, %v527
    %v531 = vld [vmem:[%s376 + $0x9] sm:$0x1]
    %v532 = vld [vmem:[%s376 + $0x39] sm:$0x1]
    %v535 = vsel %vm23, %v531, %v531
    %v536 = vsel %vm25, %v531, %v535
    %v537 = vrot.slane %v532, 7
    %v538 = vsel %vm28, %v537, %v536
    %v539 = vsel %vm30, %v537, %v538
    %v540 = vsel %vm32, %v537, %v539
    %v541 = vsel %vm34, %v537, %v540
    %542 = vrot.lane.b32.xlu0 %v541, 63
    %v543 = vpop.permute.xlu0 %542
    %vm545 = vcmask 599544
    %546 = vst.msk [vmem:[#allocation2 + $0x4] sm:$0x3] %vm545, %v543
    %v547 = vld [vmem:[%s376 + $0xa] sm:$0x1]
    %v548 = vld [vmem:[%s376 + $0x3a] sm:$0x1]
    %v551 = vsel %vm23, %v547, %v547
    %v552 = vsel %vm25, %v547, %v551
    %v553 = vrot.slane %v548, 7
    %v554 = vsel %vm28, %v553, %v552
    %v555 = vsel %vm30, %v553, %v554
    %v556 = vsel %vm32, %v553, %v555
    %v557 = vsel %vm34, %v553, %v556
    %558 = vrot.lane.b32.xlu0 %v557, 96
    %v559 = vpop.permute.xlu0 %558
    %vm561 = vcmask 870144
    %562 = vst.msk [vmem:[#allocation2 + $0x4] sm:$0x3] %vm561, %v559
    %v563 = vld [vmem:[#allocation2] sm:$0x3f]
    %565 = vst [vmem:[#allocation1] ss:$4 sm:$0xff] %v563
    %v566 = vld.sshfl [vmem:[#allocation1] sm:$0xff pattern:$0x73625140]
    %v567 = vld.sshfl [vmem:[#allocation1 + $0x8] sm:$0xff pattern:$0x73625140]
    %v568 = vld.sshfl [vmem:[#allocation1 + $0x10] sm:$0xff pattern:$0x73625140]
    %v572 = vpack.c.bf16 %v566, %v566
    %v573 = vpack.c.bf16 %v567, %v567
    %v574 = vpack.c.bf16 %v568, %v568
    %v575 = vld [vmem:[%s1] sm:$0xff]
    %v576 = vld [vmem:[%s1 + $0x8] sm:$0xff]
    %v577 = vld [vmem:[%s1 + $0x10] sm:$0xff]
    %v578 = vld [vmem:[%s1 + $0x18] sm:$0xff]
    %v579 = vld [vmem:[%s1 + $0x20] sm:$0xff]
    %v580 = vld [vmem:[%s1 + $0x28] sm:$0xf]
    %v581 = vld [vmem:[%s1 + $0x2c] sm:$0xff]
    %v582 = vld [vmem:[%s1 + $0x34] sm:$0xff]
    %v583 = vld [vmem:[%s1 + $0x3c] sm:$0xff]
    %v584 = vld [vmem:[%s1 + $0x44] sm:$0xff]
    %v585 = vld [vmem:[%s1 + $0x4c] sm:$0xff]
    %v586 = vld [vmem:[%s1 + $0x54] sm:$0xf]
    %v587 = vld [vmem:[%s1 + $0x58] sm:$0xff]
    %v588 = vld [vmem:[%s1 + $0x60] sm:$0xff]
    %v589 = vld [vmem:[%s1 + $0x68] sm:$0xff]
    %v590 = vld [vmem:[%s1 + $0x70] sm:$0xff]
    %v591 = vld [vmem:[%s1 + $0x78] sm:$0xff]
    %v592 = vld [vmem:[%s1 + $0x80] sm:$0xf]
    %v593 = vld [vmem:[%s1 + $0x84] sm:$0xff]
    %v594 = vld [vmem:[%s1 + $0x8c] sm:$0xff]
    %v595 = vld [vmem:[%s1 + $0x94] sm:$0xff]
    %v596 = vld [vmem:[%s1 + $0x9c] sm:$0xff]
    %v597 = vld [vmem:[%s1 + $0xa4] sm:$0xff]
    %v598 = vld [vmem:[%s1 + $0xac] sm:$0xf]
    %v599 = vld [vmem:[%s1 + $0xb0] sm:$0xff]
    %v600 = vld [vmem:[%s1 + $0xb8] sm:$0xff]
    %v601 = vld [vmem:[%s1 + $0xc0] sm:$0xff]
    %v602 = vld [vmem:[%s1 + $0xc8] sm:$0xff]
    %v603 = vld [vmem:[%s1 + $0xd0] sm:$0xff]
    %v604 = vld [vmem:[%s1 + $0xd8] sm:$0xf]
    %v605 = vld [vmem:[%s1 + $0xdc] sm:$0xff]
    %v606 = vld [vmem:[%s1 + $0xe4] sm:$0xff]
    %v607 = vld [vmem:[%s1 + $0xec] sm:$0xff]
    %v608 = vld [vmem:[%s1 + $0xf4] sm:$0xff]
    %v609 = vld [vmem:[%s1 + $0xfc] sm:$0xff]
    %v610 = vld [vmem:[%s1 + $0x104] sm:$0xf]
    %v611 = vld [vmem:[%s1 + $0x108] sm:$0xff]
    %v612 = vld [vmem:[%s1 + $0x110] sm:$0xff]
    %v613 = vld [vmem:[%s1 + $0x118] sm:$0xff]
    %v614 = vld [vmem:[%s1 + $0x120] sm:$0xff]
    %v615 = vld [vmem:[%s1 + $0x128] sm:$0xff]
    %v616 = vld [vmem:[%s1 + $0x130] sm:$0xf]
    %v617 = vld [vmem:[%s1 + $0x134] sm:$0xff]
    %v618 = vld [vmem:[%s1 + $0x13c] sm:$0xff]
    %v619 = vld [vmem:[%s1 + $0x144] sm:$0xff]
    %v620 = vld [vmem:[%s1 + $0x14c] sm:$0xff]
    %v621 = vld [vmem:[%s1 + $0x154] sm:$0xff]
    %v622 = vld [vmem:[%s1 + $0x15c] sm:$0xf]
    %v623 = vld [vmem:[%s1 + $0x160] sm:$0xff]
    %v624 = vld [vmem:[%s1 + $0x168] sm:$0xff]
    %v625 = vld [vmem:[%s1 + $0x170] sm:$0xff]
    %v626 = vld [vmem:[%s1 + $0x178] sm:$0xff]
    %v627 = vld [vmem:[%s1 + $0x180] sm:$0xff]
    %v628 = vld [vmem:[%s1 + $0x188] sm:$0xf]
    %v629 = vld [vmem:[%s1 + $0x18c] sm:$0xff]
    %v630 = vld [vmem:[%s1 + $0x194] sm:$0xff]
    %v631 = vld [vmem:[%s1 + $0x19c] sm:$0xff]
    %v632 = vld [vmem:[%s1 + $0x1a4] sm:$0xff]
    %v633 = vld [vmem:[%s1 + $0x1ac] sm:$0xff]
    %v634 = vld [vmem:[%s1 + $0x1b4] sm:$0xf]
    %v635 = vld [vmem:[%s1 + $0x1b8] sm:$0xff]
    %v636 = vld [vmem:[%s1 + $0x1c0] sm:$0xff]
    %v637 = vld [vmem:[%s1 + $0x1c8] sm:$0xff]
    %v638 = vld [vmem:[%s1 + $0x1d0] sm:$0xff]
    %v639 = vld [vmem:[%s1 + $0x1d8] sm:$0xff]
    %v640 = vld [vmem:[%s1 + $0x1e0] sm:$0xf]
    %v641 = vld [vmem:[%s1 + $0x1e4] sm:$0xff]
    %v642 = vld [vmem:[%s1 + $0x1ec] sm:$0xff]
    %v643 = vld [vmem:[%s1 + $0x1f4] sm:$0xff]
    %v644 = vld [vmem:[%s1 + $0x1fc] sm:$0xff]
    %v645 = vld [vmem:[%s1 + $0x204] sm:$0xff]
    %v646 = vld [vmem:[%s1 + $0x20c] sm:$0xf]
    %v647 = vld [vmem:[%s1 + $0x210] sm:$0xff]
    %v648 = vld [vmem:[%s1 + $0x218] sm:$0xff]
    %v649 = vld [vmem:[%s1 + $0x220] sm:$0xff]
    %v650 = vld [vmem:[%s1 + $0x228] sm:$0xff]
    %v651 = vld [vmem:[%s1 + $0x230] sm:$0xff]
    %v652 = vld [vmem:[%s1 + $0x238] sm:$0xf]
    %v653 = vld [vmem:[%s1 + $0x23c] sm:$0xff]
    %v654 = vld [vmem:[%s1 + $0x244] sm:$0xff]
    %v655 = vld [vmem:[%s1 + $0x24c] sm:$0xff]
    %v656 = vld [vmem:[%s1 + $0x254] sm:$0xff]
    %v657 = vld [vmem:[%s1 + $0x25c] sm:$0xff]
    %v658 = vld [vmem:[%s1 + $0x264] sm:$0xf]
    %v659 = vld [vmem:[%s1 + $0x268] sm:$0xff]
    %v660 = vld [vmem:[%s1 + $0x270] sm:$0xff]
    %v661 = vld [vmem:[%s1 + $0x278] sm:$0xff]
    %v662 = vld [vmem:[%s1 + $0x280] sm:$0xff]
    %v663 = vld [vmem:[%s1 + $0x288] sm:$0xff]
    %v664 = vld [vmem:[%s1 + $0x290] sm:$0xf]
    %v665 = vld [vmem:[%s1 + $0x294] sm:$0xff]
    %v666 = vld [vmem:[%s1 + $0x29c] sm:$0xff]
    %v667 = vld [vmem:[%s1 + $0x2a4] sm:$0xff]
    %v668 = vld [vmem:[%s1 + $0x2ac] sm:$0xff]
    %v669 = vld [vmem:[%s1 + $0x2b4] sm:$0xff]
    %v670 = vld [vmem:[%s1 + $0x2bc] sm:$0xf]
    %v671 = vld [vmem:[%s1 + $0x2c0] sm:$0xff]
    %v672 = vld [vmem:[%s1 + $0x2c8] sm:$0xff]
    %v673 = vld [vmem:[%s1 + $0x2d0] sm:$0xff]
    %v674 = vld [vmem:[%s1 + $0x2d8] sm:$0xff]
    %v675 = vld [vmem:[%s1 + $0x2e0] sm:$0xff]
    %v676 = vld [vmem:[%s1 + $0x2e8] sm:$0xf]
    %v677 = vld [vmem:[%s1 + $0x2ec] sm:$0xff]
    %v678 = vld [vmem:[%s1 + $0x2f4] sm:$0xff]
    %v679 = vld [vmem:[%s1 + $0x2fc] sm:$0xff]
    %v680 = vld [vmem:[%s1 + $0x304] sm:$0xff]
    %v681 = vld [vmem:[%s1 + $0x30c] sm:$0xff]
    %v682 = vld [vmem:[%s1 + $0x314] sm:$0xf]
    %v683 = vld [vmem:[%s1 + $0x318] sm:$0xff]
    %v684 = vld [vmem:[%s1 + $0x320] sm:$0xff]
    %v685 = vld [vmem:[%s1 + $0x328] sm:$0xff]
    %v686 = vld [vmem:[%s1 + $0x330] sm:$0xff]
    %v687 = vld [vmem:[%s1 + $0x338] sm:$0xff]
    %v688 = vld [vmem:[%s1 + $0x340] sm:$0xf]
    %v689 = vld [vmem:[%s1 + $0x344] sm:$0xff]
    %v690 = vld [vmem:[%s1 + $0x34c] sm:$0xff]
    %v691 = vld [vmem:[%s1 + $0x354] sm:$0xff]
    %v692 = vld [vmem:[%s1 + $0x35c] sm:$0xff]
    %v693 = vld [vmem:[%s1 + $0x364] sm:$0xff]
    %v694 = vld [vmem:[%s1 + $0x36c] sm:$0xf]
    %v695 = vld [vmem:[%s1 + $0x370] sm:$0xff]
    %v696 = vld [vmem:[%s1 + $0x378] sm:$0xff]
    %v697 = vld [vmem:[%s1 + $0x380] sm:$0xff]
    %v698 = vld [vmem:[%s1 + $0x388] sm:$0xff]
    %v699 = vld [vmem:[%s1 + $0x390] sm:$0xff]
    %v700 = vld [vmem:[%s1 + $0x398] sm:$0xf]
    %v701 = vld [vmem:[%s1 + $0x39c] sm:$0xff]
    %v702 = vld [vmem:[%s1 + $0x3a4] sm:$0xff]
    %v703 = vld [vmem:[%s1 + $0x3ac] sm:$0xff]
    %v704 = vld [vmem:[%s1 + $0x3b4] sm:$0xff]
    %v705 = vld [vmem:[%s1 + $0x3bc] sm:$0xff]
    %v706 = vld [vmem:[%s1 + $0x3c4] sm:$0xf]
    %v707 = vld [vmem:[%s1 + $0x3c8] sm:$0xff]
    %v708 = vld [vmem:[%s1 + $0x3d0] sm:$0xff]
    %v709 = vld [vmem:[%s1 + $0x3d8] sm:$0xff]
    %v710 = vld [vmem:[%s1 + $0x3e0] sm:$0xff]
    %v711 = vld [vmem:[%s1 + $0x3e8] sm:$0xff]
    %v712 = vld [vmem:[%s1 + $0x3f0] sm:$0xf]
    %v713 = vld [vmem:[%s1 + $0x3f4] sm:$0xff]
    %v714 = vld [vmem:[%s1 + $0x3fc] sm:$0xff]
    %v715 = vld [vmem:[%s1 + $0x404] sm:$0xff]
    %v716 = vld [vmem:[%s1 + $0x40c] sm:$0xff]
    %v717 = vld [vmem:[%s1 + $0x414] sm:$0xff]
    %v718 = vld [vmem:[%s1 + $0x41c] sm:$0xf]
    %v719 = vld [vmem:[%s1 + $0x420] sm:$0xff]
    %v720 = vld [vmem:[%s1 + $0x428] sm:$0xff]
    %v721 = vld [vmem:[%s1 + $0x430] sm:$0xff]
    %v722 = vld [vmem:[%s1 + $0x438] sm:$0xff]
    %v723 = vld [vmem:[%s1 + $0x440] sm:$0xff]
    %v724 = vld [vmem:[%s1 + $0x448] sm:$0xf]
    %v725 = vld [vmem:[%s1 + $0x44c] sm:$0xff]
    %v726 = vld [vmem:[%s1 + $0x454] sm:$0xff]
    %v727 = vld [vmem:[%s1 + $0x45c] sm:$0xff]
    %v728 = vld [vmem:[%s1 + $0x464] sm:$0xff]
    %v729 = vld [vmem:[%s1 + $0x46c] sm:$0xff]
    %v730 = vld [vmem:[%s1 + $0x474] sm:$0xf]
    %v731 = vld [vmem:[%s1 + $0x478] sm:$0xff]
    %v732 = vld [vmem:[%s1 + $0x480] sm:$0xff]
    %v733 = vld [vmem:[%s1 + $0x488] sm:$0xff]
    %v734 = vld [vmem:[%s1 + $0x490] sm:$0xff]
    %v735 = vld [vmem:[%s1 + $0x498] sm:$0xff]
    %v736 = vld [vmem:[%s1 + $0x4a0] sm:$0xf]
    %v737 = vld [vmem:[%s1 + $0x4a4] sm:$0xff]
    %v738 = vld [vmem:[%s1 + $0x4ac] sm:$0xff]
    %v739 = vld [vmem:[%s1 + $0x4b4] sm:$0xff]
    %v740 = vld [vmem:[%s1 + $0x4bc] sm:$0xff]
    %v741 = vld [vmem:[%s1 + $0x4c4] sm:$0xff]
    %v742 = vld [vmem:[%s1 + $0x4cc] sm:$0xf]
    %v743 = vld [vmem:[%s1 + $0x4d0] sm:$0xff]
    %v744 = vld [vmem:[%s1 + $0x4d8] sm:$0xff]
    %v745 = vld [vmem:[%s1 + $0x4e0] sm:$0xff]
    %v746 = vld [vmem:[%s1 + $0x4e8] sm:$0xff]
    %v747 = vld [vmem:[%s1 + $0x4f0] sm:$0xff]
    %v748 = vld [vmem:[%s1 + $0x4f8] sm:$0xf]
    %v749 = vld [vmem:[%s1 + $0x4fc] sm:$0xff]
    %v750 = vld [vmem:[%s1 + $0x504] sm:$0xff]
    %v751 = vld [vmem:[%s1 + $0x50c] sm:$0xff]
    %v752 = vld [vmem:[%s1 + $0x514] sm:$0xff]
    %v753 = vld [vmem:[%s1 + $0x51c] sm:$0xff]
    %v754 = vld [vmem:[%s1 + $0x524] sm:$0xf]
    %v755 = vld [vmem:[%s1 + $0x528] sm:$0xff]
    %v756 = vld [vmem:[%s1 + $0x530] sm:$0xff]
    %v757 = vld [vmem:[%s1 + $0x538] sm:$0xff]
    %v758 = vld [vmem:[%s1 + $0x540] sm:$0xff]
    %v759 = vld [vmem:[%s1 + $0x548] sm:$0xff]
    %v760 = vld [vmem:[%s1 + $0x550] sm:$0xf]
    %v761 = vld [vmem:[%s1 + $0x554] sm:$0xff]
    %v762 = vld [vmem:[%s1 + $0x55c] sm:$0xff]
    %v763 = vld [vmem:[%s1 + $0x564] sm:$0xff]
    %v764 = vld [vmem:[%s1 + $0x56c] sm:$0xff]
    %v765 = vld [vmem:[%s1 + $0x574] sm:$0xff]
    %v766 = vld [vmem:[%s1 + $0x57c] sm:$0xf]
    %v767 = vld [vmem:[%s1 + $0x580] sm:$0xff]
    %v768 = vld [vmem:[%s1 + $0x588] sm:$0xff]
    %v769 = vld [vmem:[%s1 + $0x590] sm:$0xff]
    %v770 = vld [vmem:[%s1 + $0x598] sm:$0xff]
    %v771 = vld [vmem:[%s1 + $0x5a0] sm:$0xff]
    %v772 = vld [vmem:[%s1 + $0x5a8] sm:$0xf]
    %v773 = vld [vmem:[%s1 + $0x5ac] sm:$0xff]
    %v774 = vld [vmem:[%s1 + $0x5b4] sm:$0xff]
    %v775 = vld [vmem:[%s1 + $0x5bc] sm:$0xff]
    %v776 = vld [vmem:[%s1 + $0x5c4] sm:$0xff]
    %v777 = vld [vmem:[%s1 + $0x5cc] sm:$0xff]
    %v778 = vld [vmem:[%s1 + $0x5d4] sm:$0xf]
    %v779 = vld [vmem:[%s1 + $0x5d8] sm:$0xff]
    %v780 = vld [vmem:[%s1 + $0x5e0] sm:$0xff]
    %v781 = vld [vmem:[%s1 + $0x5e8] sm:$0xff]
    %v782 = vld [vmem:[%s1 + $0x5f0] sm:$0xff]
    %v783 = vld [vmem:[%s1 + $0x5f8] sm:$0xff]
    %v784 = vld [vmem:[%s1 + $0x600] sm:$0xf]
    %v785 = vld [vmem:[%s1 + $0x604] sm:$0xff]
    %v786 = vld [vmem:[%s1 + $0x60c] sm:$0xff]
    %v787 = vld [vmem:[%s1 + $0x614] sm:$0xff]
    %v788 = vld [vmem:[%s1 + $0x61c] sm:$0xff]
    %v789 = vld [vmem:[%s1 + $0x624] sm:$0xff]
    %v790 = vld [vmem:[%s1 + $0x62c] sm:$0xf]
    %v791 = vld [vmem:[%s1 + $0x630] sm:$0xff]
    %v792 = vld [vmem:[%s1 + $0x638] sm:$0xff]
    %v793 = vld [vmem:[%s1 + $0x640] sm:$0xff]
    %v794 = vld [vmem:[%s1 + $0x648] sm:$0xff]
    %v795 = vld [vmem:[%s1 + $0x650] sm:$0xff]
    %v796 = vld [vmem:[%s1 + $0x658] sm:$0xf]
    %v797 = vld [vmem:[%s1 + $0x65c] sm:$0xff]
    %v798 = vld [vmem:[%s1 + $0x664] sm:$0xff]
    %v799 = vld [vmem:[%s1 + $0x66c] sm:$0xff]
    %v800 = vld [vmem:[%s1 + $0x674] sm:$0xff]
    %v801 = vld [vmem:[%s1 + $0x67c] sm:$0xff]
    %v802 = vld [vmem:[%s1 + $0x684] sm:$0xf]
    %v803 = vld [vmem:[%s1 + $0x688] sm:$0xff]
    %v804 = vld [vmem:[%s1 + $0x690] sm:$0xff]
    %v805 = vld [vmem:[%s1 + $0x698] sm:$0xff]
    %v806 = vld [vmem:[%s1 + $0x6a0] sm:$0xff]
    %v807 = vld [vmem:[%s1 + $0x6a8] sm:$0xff]
    %v808 = vld [vmem:[%s1 + $0x6b0] sm:$0xf]
    %v809 = vld [vmem:[%s1 + $0x6b4] sm:$0xff]
    %v810 = vld [vmem:[%s1 + $0x6bc] sm:$0xff]
    %v811 = vld [vmem:[%s1 + $0x6c4] sm:$0xff]
    %v812 = vld [vmem:[%s1 + $0x6cc] sm:$0xff]
    %v813 = vld [vmem:[%s1 + $0x6d4] sm:$0xff]
    %v814 = vld [vmem:[%s1 + $0x6dc] sm:$0xf]
    %v815 = vld [vmem:[%s1 + $0x6e0] sm:$0xff]
    %v816 = vld [vmem:[%s1 + $0x6e8] sm:$0xff]
    %v817 = vld [vmem:[%s1 + $0x6f0] sm:$0xff]
    %v818 = vld [vmem:[%s1 + $0x6f8] sm:$0xff]
    %v819 = vld [vmem:[%s1 + $0x700] sm:$0xff]
    %v820 = vld [vmem:[%s1 + $0x708] sm:$0xf]
    %v821 = vld [vmem:[%s1 + $0x70c] sm:$0xff]
    %v822 = vld [vmem:[%s1 + $0x714] sm:$0xff]
    %v823 = vld [vmem:[%s1 + $0x71c] sm:$0xff]
    %v824 = vld [vmem:[%s1 + $0x724] sm:$0xff]
    %v825 = vld [vmem:[%s1 + $0x72c] sm:$0xff]
    %v826 = vld [vmem:[%s1 + $0x734] sm:$0xf]
    %v827 = vld [vmem:[%s1 + $0x738] sm:$0xff]
    %v828 = vld [vmem:[%s1 + $0x740] sm:$0xff]
    %v829 = vld [vmem:[%s1 + $0x748] sm:$0xff]
    %v830 = vld [vmem:[%s1 + $0x750] sm:$0xff]
    %v831 = vld [vmem:[%s1 + $0x758] sm:$0xff]
    %v832 = vld [vmem:[%s1 + $0x760] sm:$0xf]
    %v833 = vld [vmem:[%s1 + $0x764] sm:$0xff]
    %v834 = vld [vmem:[%s1 + $0x76c] sm:$0xff]
    %v835 = vld [vmem:[%s1 + $0x774] sm:$0xff]
    %v836 = vld [vmem:[%s1 + $0x77c] sm:$0xff]
    %v837 = vld [vmem:[%s1 + $0x784] sm:$0xff]
    %v838 = vld [vmem:[%s1 + $0x78c] sm:$0xf]
    %v839 = vld [vmem:[%s1 + $0x790] sm:$0xff]
    %v840 = vld [vmem:[%s1 + $0x798] sm:$0xff]
    %v841 = vld [vmem:[%s1 + $0x7a0] sm:$0xff]
    %v842 = vld [vmem:[%s1 + $0x7a8] sm:$0xff]
    %v843 = vld [vmem:[%s1 + $0x7b0] sm:$0xff]
    %v844 = vld [vmem:[%s1 + $0x7b8] sm:$0xf]
    %v845 = vld [vmem:[%s1 + $0x7bc] sm:$0xff]
    %v846 = vld [vmem:[%s1 + $0x7c4] sm:$0xff]
    %v847 = vld [vmem:[%s1 + $0x7cc] sm:$0xff]
    %v848 = vld [vmem:[%s1 + $0x7d4] sm:$0xff]
    %v849 = vld [vmem:[%s1 + $0x7dc] sm:$0xff]
    %v850 = vld [vmem:[%s1 + $0x7e4] sm:$0xf]
    %v851 = vld [vmem:[%s1 + $0x7e8] sm:$0xff]
    %v852 = vld [vmem:[%s1 + $0x7f0] sm:$0xff]
    %v853 = vld [vmem:[%s1 + $0x7f8] sm:$0xff]
    %v854 = vld [vmem:[%s1 + $0x800] sm:$0xff]
    %v855 = vld [vmem:[%s1 + $0x808] sm:$0xff]
    %v856 = vld [vmem:[%s1 + $0x810] sm:$0xf]
    %v857 = vld [vmem:[%s1 + $0x814] sm:$0xff]
    %v858 = vld [vmem:[%s1 + $0x81c] sm:$0xff]
    %v859 = vld [vmem:[%s1 + $0x824] sm:$0xff]
    %v860 = vld [vmem:[%s1 + $0x82c] sm:$0xff]
    %v861 = vld [vmem:[%s1 + $0x834] sm:$0xff]
    %v862 = vld [vmem:[%s1 + $0x83c] sm:$0xf]
    %v1151 = vunpack.c.l.b16 %v575
    %v1152 = vunpack.c.h.b16 %v575
    %v1153 = vunpack.c.l.b16 %v576
    %v1154 = vunpack.c.h.b16 %v576
    %v1155 = vunpack.c.l.b16 %v577
    %v1156 = vunpack.c.h.b16 %v577
    %v1157 = vunpack.c.l.b16 %v578
    %v1158 = vunpack.c.h.b16 %v578
    %v1159 = vunpack.c.l.b16 %v579
    %v1160 = vunpack.c.h.b16 %v579
    %v1161 = vunpack.c.l.b16 %v580
    %v1162 = vunpack.c.l.b16 %v581
    %v1163 = vunpack.c.h.b16 %v581
    %v1164 = vunpack.c.l.b16 %v582
    %v1165 = vunpack.c.h.b16 %v582
    %v1166 = vunpack.c.l.b16 %v583
    %v1167 = vunpack.c.h.b16 %v583
    %v1168 = vunpack.c.l.b16 %v584
    %v1169 = vunpack.c.h.b16 %v584
    %v1170 = vunpack.c.l.b16 %v585
    %v1171 = vunpack.c.h.b16 %v585
    %v1172 = vunpack.c.l.b16 %v586
    %v1173 = vunpack.c.l.b16 %v587
    %v1174 = vunpack.c.h.b16 %v587
    %v1175 = vunpack.c.l.b16 %v588
    %v1176 = vunpack.c.h.b16 %v588
    %v1177 = vunpack.c.l.b16 %v589
    %v1178 = vunpack.c.h.b16 %v589
    %v1179 = vunpack.c.l.b16 %v590
    %v1180 = vunpack.c.h.b16 %v590
    %v1181 = vunpack.c.l.b16 %v591
    %v1182 = vunpack.c.h.b16 %v591
    %v1183 = vunpack.c.l.b16 %v592
    %v1184 = vunpack.c.l.b16 %v593
    %v1185 = vunpack.c.h.b16 %v593
    %v1186 = vunpack.c.l.b16 %v594
    %v1187 = vunpack.c.h.b16 %v594
    %v1188 = vunpack.c.l.b16 %v595
    %v1189 = vunpack.c.h.b16 %v595
    %v1190 = vunpack.c.l.b16 %v596
    %v1191 = vunpack.c.h.b16 %v596
    %v1192 = vunpack.c.l.b16 %v597
    %v1193 = vunpack.c.h.b16 %v597
    %v1194 = vunpack.c.l.b16 %v598
    %v1195 = vunpack.c.l.b16 %v599
    %v1196 = vunpack.c.h.b16 %v599
    %v1197 = vunpack.c.l.b16 %v600
    %v1198 = vunpack.c.h.b16 %v600
    %v1199 = vunpack.c.l.b16 %v601
    %v1200 = vunpack.c.h.b16 %v601
    %v1201 = vunpack.c.l.b16 %v602
    %v1202 = vunpack.c.h.b16 %v602
    %v1203 = vunpack.c.l.b16 %v603
    %v1204 = vunpack.c.h.b16 %v603
    %v1205 = vunpack.c.l.b16 %v604
    %v1206 = vunpack.c.l.b16 %v605
    %v1207 = vunpack.c.h.b16 %v605
    %v1208 = vunpack.c.l.b16 %v606
    %v1209 = vunpack.c.h.b16 %v606
    %v1210 = vunpack.c.l.b16 %v607
    %v1211 = vunpack.c.h.b16 %v607
    %v1212 = vunpack.c.l.b16 %v608
    %v1213 = vunpack.c.h.b16 %v608
    %v1214 = vunpack.c.l.b16 %v609
    %v1215 = vunpack.c.h.b16 %v609
    %v1216 = vunpack.c.l.b16 %v610
    %v1217 = vunpack.c.l.b16 %v611
    %v1218 = vunpack.c.h.b16 %v611
    %v1219 = vunpack.c.l.b16 %v612
    %v1220 = vunpack.c.h.b16 %v612
    %v1221 = vunpack.c.l.b16 %v613
    %v1222 = vunpack.c.h.b16 %v613
    %v1223 = vunpack.c.l.b16 %v614
    %v1224 = vunpack.c.h.b16 %v614
    %v1225 = vunpack.c.l.b16 %v615
    %v1226 = vunpack.c.h.b16 %v615
    %v1227 = vunpack.c.l.b16 %v616
    %v1228 = vunpack.c.l.b16 %v617
    %v1229 = vunpack.c.h.b16 %v617
    %v1230 = vunpack.c.l.b16 %v618
    %v1231 = vunpack.c.h.b16 %v618
    %v1232 = vunpack.c.l.b16 %v619
    %v1233 = vunpack.c.h.b16 %v619
    %v1234 = vunpack.c.l.b16 %v620
    %v1235 = vunpack.c.h.b16 %v620
    %v1236 = vunpack.c.l.b16 %v621
    %v1237 = vunpack.c.h.b16 %v621
    %v1238 = vunpack.c.l.b16 %v622
    %v1239 = vunpack.c.l.b16 %v623
    %v1240 = vunpack.c.h.b16 %v623
    %v1241 = vunpack.c.l.b16 %v624
    %v1242 = vunpack.c.h.b16 %v624
    %v1243 = vunpack.c.l.b16 %v625
    %v1244 = vunpack.c.h.b16 %v625
    %v1245 = vunpack.c.l.b16 %v626
    %v1246 = vunpack.c.h.b16 %v626
    %v1247 = vunpack.c.l.b16 %v627
    %v1248 = vunpack.c.h.b16 %v627
    %v1249 = vunpack.c.l.b16 %v628
    %v1250 = vunpack.c.l.b16 %v629
    %v1251 = vunpack.c.h.b16 %v629
    %v1252 = vunpack.c.l.b16 %v630
    %v1253 = vunpack.c.h.b16 %v630
    %v1254 = vunpack.c.l.b16 %v631
    %v1255 = vunpack.c.h.b16 %v631
    %v1256 = vunpack.c.l.b16 %v632
    %v1257 = vunpack.c.h.b16 %v632
    %v1258 = vunpack.c.l.b16 %v633
    %v1259 = vunpack.c.h.b16 %v633
    %v1260 = vunpack.c.l.b16 %v634
    %v1261 = vunpack.c.l.b16 %v635
    %v1262 = vunpack.c.h.b16 %v635
    %v1263 = vunpack.c.l.b16 %v636
    %v1264 = vunpack.c.h.b16 %v636
    %v1265 = vunpack.c.l.b16 %v637
    %v1266 = vunpack.c.h.b16 %v637
    %v1267 = vunpack.c.l.b16 %v638
    %v1268 = vunpack.c.h.b16 %v638
    %v1269 = vunpack.c.l.b16 %v639
    %v1270 = vunpack.c.h.b16 %v639
    %v1271 = vunpack.c.l.b16 %v640
    %v1272 = vunpack.c.l.b16 %v641
    %v1273 = vunpack.c.h.b16 %v641
    %v1274 = vunpack.c.l.b16 %v642
    %v1275 = vunpack.c.h.b16 %v642
    %v1276 = vunpack.c.l.b16 %v643
    %v1277 = vunpack.c.h.b16 %v643
    %v1278 = vunpack.c.l.b16 %v644
    %v1279 = vunpack.c.h.b16 %v644
    %v1280 = vunpack.c.l.b16 %v645
    %v1281 = vunpack.c.h.b16 %v645
    %v1282 = vunpack.c.l.b16 %v646
    %v1283 = vunpack.c.l.b16 %v647
    %v1284 = vunpack.c.h.b16 %v647
    %v1285 = vunpack.c.l.b16 %v648
    %v1286 = vunpack.c.h.b16 %v648
    %v1287 = vunpack.c.l.b16 %v649
    %v1288 = vunpack.c.h.b16 %v649
    %v1289 = vunpack.c.l.b16 %v650
    %v1290 = vunpack.c.h.b16 %v650
    %v1291 = vunpack.c.l.b16 %v651
    %v1292 = vunpack.c.h.b16 %v651
    %v1293 = vunpack.c.l.b16 %v652
    %v1294 = vunpack.c.l.b16 %v653
    %v1295 = vunpack.c.h.b16 %v653
    %v1296 = vunpack.c.l.b16 %v654
    %v1297 = vunpack.c.h.b16 %v654
    %v1298 = vunpack.c.l.b16 %v655
    %v1299 = vunpack.c.h.b16 %v655
    %v1300 = vunpack.c.l.b16 %v656
    %v1301 = vunpack.c.h.b16 %v656
    %v1302 = vunpack.c.l.b16 %v657
    %v1303 = vunpack.c.h.b16 %v657
    %v1304 = vunpack.c.l.b16 %v658
    %v1305 = vunpack.c.l.b16 %v659
    %v1306 = vunpack.c.h.b16 %v659
    %v1307 = vunpack.c.l.b16 %v660
    %v1308 = vunpack.c.h.b16 %v660
    %v1309 = vunpack.c.l.b16 %v661
    %v1310 = vunpack.c.h.b16 %v661
    %v1311 = vunpack.c.l.b16 %v662
    %v1312 = vunpack.c.h.b16 %v662
    %v1313 = vunpack.c.l.b16 %v663
    %v1314 = vunpack.c.h.b16 %v663
    %v1315 = vunpack.c.l.b16 %v664
    %v1316 = vunpack.c.l.b16 %v665
    %v1317 = vunpack.c.h.b16 %v665
    %v1318 = vunpack.c.l.b16 %v666
    %v1319 = vunpack.c.h.b16 %v666
    %v1320 = vunpack.c.l.b16 %v667
    %v1321 = vunpack.c.h.b16 %v667
    %v1322 = vunpack.c.l.b16 %v668
    %v1323 = vunpack.c.h.b16 %v668
    %v1324 = vunpack.c.l.b16 %v669
    %v1325 = vunpack.c.h.b16 %v669
    %v1326 = vunpack.c.l.b16 %v670
    %v1327 = vunpack.c.l.b16 %v671
    %v1328 = vunpack.c.h.b16 %v671
    %v1329 = vunpack.c.l.b16 %v672
    %v1330 = vunpack.c.h.b16 %v672
    %v1331 = vunpack.c.l.b16 %v673
    %v1332 = vunpack.c.h.b16 %v673
    %v1333 = vunpack.c.l.b16 %v674
    %v1334 = vunpack.c.h.b16 %v674
    %v1335 = vunpack.c.l.b16 %v675
    %v1336 = vunpack.c.h.b16 %v675
    %v1337 = vunpack.c.l.b16 %v676
    %v1338 = vunpack.c.l.b16 %v677
    %v1339 = vunpack.c.h.b16 %v677
    %v1340 = vunpack.c.l.b16 %v678
    %v1341 = vunpack.c.h.b16 %v678
    %v1342 = vunpack.c.l.b16 %v679
    %v1343 = vunpack.c.h.b16 %v679
    %v1344 = vunpack.c.l.b16 %v680
    %v1345 = vunpack.c.h.b16 %v680
    %v1346 = vunpack.c.l.b16 %v681
    %v1347 = vunpack.c.h.b16 %v681
    %v1348 = vunpack.c.l.b16 %v682
    %v1349 = vunpack.c.l.b16 %v683
    %v1350 = vunpack.c.h.b16 %v683
    %v1351 = vunpack.c.l.b16 %v684
    %v1352 = vunpack.c.h.b16 %v684
    %v1353 = vunpack.c.l.b16 %v685
    %v1354 = vunpack.c.h.b16 %v685
    %v1355 = vunpack.c.l.b16 %v686
    %v1356 = vunpack.c.h.b16 %v686
    %v1357 = vunpack.c.l.b16 %v687
    %v1358 = vunpack.c.h.b16 %v687
    %v1359 = vunpack.c.l.b16 %v688
    %v1360 = vunpack.c.l.b16 %v689
    %v1361 = vunpack.c.h.b16 %v689
    %v1362 = vunpack.c.l.b16 %v690
    %v1363 = vunpack.c.h.b16 %v690
    %v1364 = vunpack.c.l.b16 %v691
    %v1365 = vunpack.c.h.b16 %v691
    %v1366 = vunpack.c.l.b16 %v692
    %v1367 = vunpack.c.h.b16 %v692
    %v1368 = vunpack.c.l.b16 %v693
    %v1369 = vunpack.c.h.b16 %v693
    %v1370 = vunpack.c.l.b16 %v694
    %v1371 = vunpack.c.l.b16 %v695
    %v1372 = vunpack.c.h.b16 %v695
    %v1373 = vunpack.c.l.b16 %v696
    %v1374 = vunpack.c.h.b16 %v696
    %v1375 = vunpack.c.l.b16 %v697
    %v1376 = vunpack.c.h.b16 %v697
    %v1377 = vunpack.c.l.b16 %v698
    %v1378 = vunpack.c.h.b16 %v698
    %v1379 = vunpack.c.l.b16 %v699
    %v1380 = vunpack.c.h.b16 %v699
    %v1381 = vunpack.c.l.b16 %v700
    %v1382 = vunpack.c.l.b16 %v701
    %v1383 = vunpack.c.h.b16 %v701
    %v1384 = vunpack.c.l.b16 %v702
    %v1385 = vunpack.c.h.b16 %v702
    %v1386 = vunpack.c.l.b16 %v703
    %v1387 = vunpack.c.h.b16 %v703
    %v1388 = vunpack.c.l.b16 %v704
    %v1389 = vunpack.c.h.b16 %v704
    %v1390 = vunpack.c.l.b16 %v705
    %v1391 = vunpack.c.h.b16 %v705
    %v1392 = vunpack.c.l.b16 %v706
    %v1393 = vunpack.c.l.b16 %v707
    %v1394 = vunpack.c.h.b16 %v707
    %v1395 = vunpack.c.l.b16 %v708
    %v1396 = vunpack.c.h.b16 %v708
    %v1397 = vunpack.c.l.b16 %v709
    %v1398 = vunpack.c.h.b16 %v709
    %v1399 = vunpack.c.l.b16 %v710
    %v1400 = vunpack.c.h.b16 %v710
    %v1401 = vunpack.c.l.b16 %v711
    %v1402 = vunpack.c.h.b16 %v711
    %v1403 = vunpack.c.l.b16 %v712
    %v1404 = vunpack.c.l.b16 %v713
    %v1405 = vunpack.c.h.b16 %v713
    %v1406 = vunpack.c.l.b16 %v714
    %v1407 = vunpack.c.h.b16 %v714
    %v1408 = vunpack.c.l.b16 %v715
    %v1409 = vunpack.c.h.b16 %v715
    %v1410 = vunpack.c.l.b16 %v716
    %v1411 = vunpack.c.h.b16 %v716
    %v1412 = vunpack.c.l.b16 %v717
    %v1413 = vunpack.c.h.b16 %v717
    %v1414 = vunpack.c.l.b16 %v718
    %v1415 = vunpack.c.l.b16 %v719
    %v1416 = vunpack.c.h.b16 %v719
    %v1417 = vunpack.c.l.b16 %v720
    %v1418 = vunpack.c.h.b16 %v720
    %v1419 = vunpack.c.l.b16 %v721
    %v1420 = vunpack.c.h.b16 %v721
    %v1421 = vunpack.c.l.b16 %v722
    %v1422 = vunpack.c.h.b16 %v722
    %v1423 = vunpack.c.l.b16 %v723
    %v1424 = vunpack.c.h.b16 %v723
    %v1425 = vunpack.c.l.b16 %v724
    %v1426 = vunpack.c.l.b16 %v725
    %v1427 = vunpack.c.h.b16 %v725
    %v1428 = vunpack.c.l.b16 %v726
    %v1429 = vunpack.c.h.b16 %v726
    %v1430 = vunpack.c.l.b16 %v727
    %v1431 = vunpack.c.h.b16 %v727
    %v1432 = vunpack.c.l.b16 %v728
    %v1433 = vunpack.c.h.b16 %v728
    %v1434 = vunpack.c.l.b16 %v729
    %v1435 = vunpack.c.h.b16 %v729
    %v1436 = vunpack.c.l.b16 %v730
    %v1437 = vunpack.c.l.b16 %v731
    %v1438 = vunpack.c.h.b16 %v731
    %v1439 = vunpack.c.l.b16 %v732
    %v1440 = vunpack.c.h.b16 %v732
    %v1441 = vunpack.c.l.b16 %v733
    %v1442 = vunpack.c.h.b16 %v733
    %v1443 = vunpack.c.l.b16 %v734
    %v1444 = vunpack.c.h.b16 %v734
    %v1445 = vunpack.c.l.b16 %v735
    %v1446 = vunpack.c.h.b16 %v735
    %v1447 = vunpack.c.l.b16 %v736
    %v1448 = vunpack.c.l.b16 %v737
    %v1449 = vunpack.c.h.b16 %v737
    %v1450 = vunpack.c.l.b16 %v738
    %v1451 = vunpack.c.h.b16 %v738
    %v1452 = vunpack.c.l.b16 %v739
    %v1453 = vunpack.c.h.b16 %v739
    %v1454 = vunpack.c.l.b16 %v740
    %v1455 = vunpack.c.h.b16 %v740
    %v1456 = vunpack.c.l.b16 %v741
    %v1457 = vunpack.c.h.b16 %v741
    %v1458 = vunpack.c.l.b16 %v742
    %v1459 = vunpack.c.l.b16 %v743
    %v1460 = vunpack.c.h.b16 %v743
    %v1461 = vunpack.c.l.b16 %v744
    %v1462 = vunpack.c.h.b16 %v744
    %v1463 = vunpack.c.l.b16 %v745
    %v1464 = vunpack.c.h.b16 %v745
    %v1465 = vunpack.c.l.b16 %v746
    %v1466 = vunpack.c.h.b16 %v746
    %v1467 = vunpack.c.l.b16 %v747
    %v1468 = vunpack.c.h.b16 %v747
    %v1469 = vunpack.c.l.b16 %v748
    %v1470 = vunpack.c.l.b16 %v749
    %v1471 = vunpack.c.h.b16 %v749
    %v1472 = vunpack.c.l.b16 %v750
    %v1473 = vunpack.c.h.b16 %v750
    %v1474 = vunpack.c.l.b16 %v751
    %v1475 = vunpack.c.h.b16 %v751
    %v1476 = vunpack.c.l.b16 %v752
    %v1477 = vunpack.c.h.b16 %v752
    %v1478 = vunpack.c.l.b16 %v753
    %v1479 = vunpack.c.h.b16 %v753
    %v1480 = vunpack.c.l.b16 %v754
    %v1481 = vunpack.c.l.b16 %v755
    %v1482 = vunpack.c.h.b16 %v755
    %v1483 = vunpack.c.l.b16 %v756
    %v1484 = vunpack.c.h.b16 %v756
    %v1485 = vunpack.c.l.b16 %v757
    %v1486 = vunpack.c.h.b16 %v757
    %v1487 = vunpack.c.l.b16 %v758
    %v1488 = vunpack.c.h.b16 %v758
    %v1489 = vunpack.c.l.b16 %v759
    %v1490 = vunpack.c.h.b16 %v759
    %v1491 = vunpack.c.l.b16 %v760
    %v1492 = vunpack.c.l.b16 %v761
    %v1493 = vunpack.c.h.b16 %v761
    %v1494 = vunpack.c.l.b16 %v762
    %v1495 = vunpack.c.h.b16 %v762
    %v1496 = vunpack.c.l.b16 %v763
    %v1497 = vunpack.c.h.b16 %v763
    %v1498 = vunpack.c.l.b16 %v764
    %v1499 = vunpack.c.h.b16 %v764
    %v1500 = vunpack.c.l.b16 %v765
    %v1501 = vunpack.c.h.b16 %v765
    %v1502 = vunpack.c.l.b16 %v766
    %v1503 = vunpack.c.l.b16 %v767
    %v1504 = vunpack.c.h.b16 %v767
    %v1505 = vunpack.c.l.b16 %v768
    %v1506 = vunpack.c.h.b16 %v768
    %v1507 = vunpack.c.l.b16 %v769
    %v1508 = vunpack.c.h.b16 %v769
    %v1509 = vunpack.c.l.b16 %v770
    %v1510 = vunpack.c.h.b16 %v770
    %v1511 = vunpack.c.l.b16 %v771
    %v1512 = vunpack.c.h.b16 %v771
    %v1513 = vunpack.c.l.b16 %v772
    %v1514 = vunpack.c.l.b16 %v773
    %v1515 = vunpack.c.h.b16 %v773
    %v1516 = vunpack.c.l.b16 %v774
    %v1517 = vunpack.c.h.b16 %v774
    %v1518 = vunpack.c.l.b16 %v775
    %v1519 = vunpack.c.h.b16 %v775
    %v1520 = vunpack.c.l.b16 %v776
    %v1521 = vunpack.c.h.b16 %v776
    %v1522 = vunpack.c.l.b16 %v777
    %v1523 = vunpack.c.h.b16 %v777
    %v1524 = vunpack.c.l.b16 %v778
    %v1525 = vunpack.c.l.b16 %v779
    %v1526 = vunpack.c.h.b16 %v779
    %v1527 = vunpack.c.l.b16 %v780
    %v1528 = vunpack.c.h.b16 %v780
    %v1529 = vunpack.c.l.b16 %v781
    %v1530 = vunpack.c.h.b16 %v781
    %v1531 = vunpack.c.l.b16 %v782
    %v1532 = vunpack.c.h.b16 %v782
    %v1533 = vunpack.c.l.b16 %v783
    %v1534 = vunpack.c.h.b16 %v783
    %v1535 = vunpack.c.l.b16 %v784
    %v1536 = vunpack.c.l.b16 %v785
    %v1537 = vunpack.c.h.b16 %v785
    %v1538 = vunpack.c.l.b16 %v786
    %v1539 = vunpack.c.h.b16 %v786
    %v1540 = vunpack.c.l.b16 %v787
    %v1541 = vunpack.c.h.b16 %v787
    %v1542 = vunpack.c.l.b16 %v788
    %v1543 = vunpack.c.h.b16 %v788
    %v1544 = vunpack.c.l.b16 %v789
    %v1545 = vunpack.c.h.b16 %v789
    %v1546 = vunpack.c.l.b16 %v790
    %v1547 = vunpack.c.l.b16 %v791
    %v1548 = vunpack.c.h.b16 %v791
    %v1549 = vunpack.c.l.b16 %v792
    %v1550 = vunpack.c.h.b16 %v792
    %v1551 = vunpack.c.l.b16 %v793
    %v1552 = vunpack.c.h.b16 %v793
    %v1553 = vunpack.c.l.b16 %v794
    %v1554 = vunpack.c.h.b16 %v794
    %v1555 = vunpack.c.l.b16 %v795
    %v1556 = vunpack.c.h.b16 %v795
    %v1557 = vunpack.c.l.b16 %v796
    %v1558 = vunpack.c.l.b16 %v797
    %v1559 = vunpack.c.h.b16 %v797
    %v1560 = vunpack.c.l.b16 %v798
    %v1561 = vunpack.c.h.b16 %v798
    %v1562 = vunpack.c.l.b16 %v799
    %v1563 = vunpack.c.h.b16 %v799
    %v1564 = vunpack.c.l.b16 %v800
    %v1565 = vunpack.c.h.b16 %v800
    %v1566 = vunpack.c.l.b16 %v801
    %v1567 = vunpack.c.h.b16 %v801
    %v1568 = vunpack.c.l.b16 %v802
    %v1569 = vunpack.c.l.b16 %v803
    %v1570 = vunpack.c.h.b16 %v803
    %v1571 = vunpack.c.l.b16 %v804
    %v1572 = vunpack.c.h.b16 %v804
    %v1573 = vunpack.c.l.b16 %v805
    %v1574 = vunpack.c.h.b16 %v805
    %v1575 = vunpack.c.l.b16 %v806
    %v1576 = vunpack.c.h.b16 %v806
    %v1577 = vunpack.c.l.b16 %v807
    %v1578 = vunpack.c.h.b16 %v807
    %v1579 = vunpack.c.l.b16 %v808
    %v1580 = vunpack.c.l.b16 %v809
    %v1581 = vunpack.c.h.b16 %v809
    %v1582 = vunpack.c.l.b16 %v810
    %v1583 = vunpack.c.h.b16 %v810
    %v1584 = vunpack.c.l.b16 %v811
    %v1585 = vunpack.c.h.b16 %v811
    %v1586 = vunpack.c.l.b16 %v812
    %v1587 = vunpack.c.h.b16 %v812
    %v1588 = vunpack.c.l.b16 %v813
    %v1589 = vunpack.c.h.b16 %v813
    %v1590 = vunpack.c.l.b16 %v814
    %v1591 = vunpack.c.l.b16 %v815
    %v1592 = vunpack.c.h.b16 %v815
    %v1593 = vunpack.c.l.b16 %v816
    %v1594 = vunpack.c.h.b16 %v816
    %v1595 = vunpack.c.l.b16 %v817
    %v1596 = vunpack.c.h.b16 %v817
    %v1597 = vunpack.c.l.b16 %v818
    %v1598 = vunpack.c.h.b16 %v818
    %v1599 = vunpack.c.l.b16 %v819
    %v1600 = vunpack.c.h.b16 %v819
    %v1601 = vunpack.c.l.b16 %v820
    %v1602 = vunpack.c.l.b16 %v821
    %v1603 = vunpack.c.h.b16 %v821
    %v1604 = vunpack.c.l.b16 %v822
    %v1605 = vunpack.c.h.b16 %v822
    %v1606 = vunpack.c.l.b16 %v823
    %v1607 = vunpack.c.h.b16 %v823
    %v1608 = vunpack.c.l.b16 %v824
    %v1609 = vunpack.c.h.b16 %v824
    %v1610 = vunpack.c.l.b16 %v825
    %v1611 = vunpack.c.h.b16 %v825
    %v1612 = vunpack.c.l.b16 %v826
    %v1613 = vunpack.c.l.b16 %v827
    %v1614 = vunpack.c.h.b16 %v827
    %v1615 = vunpack.c.l.b16 %v828
    %v1616 = vunpack.c.h.b16 %v828
    %v1617 = vunpack.c.l.b16 %v829
    %v1618 = vunpack.c.h.b16 %v829
    %v1619 = vunpack.c.l.b16 %v830
    %v1620 = vunpack.c.h.b16 %v830
    %v1621 = vunpack.c.l.b16 %v831
    %v1622 = vunpack.c.h.b16 %v831
    %v1623 = vunpack.c.l.b16 %v832
    %v1624 = vunpack.c.l.b16 %v833
    %v1625 = vunpack.c.h.b16 %v833
    %v1626 = vunpack.c.l.b16 %v834
    %v1627 = vunpack.c.h.b16 %v834
    %v1628 = vunpack.c.l.b16 %v835
    %v1629 = vunpack.c.h.b16 %v835
    %v1630 = vunpack.c.l.b16 %v836
    %v1631 = vunpack.c.h.b16 %v836
    %v1632 = vunpack.c.l.b16 %v837
    %v1633 = vunpack.c.h.b16 %v837
    %v1634 = vunpack.c.l.b16 %v838
    %v1635 = vunpack.c.l.b16 %v839
    %v1636 = vunpack.c.h.b16 %v839
    %v1637 = vunpack.c.l.b16 %v840
    %v1638 = vunpack.c.h.b16 %v840
    %v1639 = vunpack.c.l.b16 %v841
    %v1640 = vunpack.c.h.b16 %v841
    %v1641 = vunpack.c.l.b16 %v842
    %v1642 = vunpack.c.h.b16 %v842
    %v1643 = vunpack.c.l.b16 %v843
    %v1644 = vunpack.c.h.b16 %v843
    %v1645 = vunpack.c.l.b16 %v844
    %v1646 = vunpack.c.l.b16 %v845
    %v1647 = vunpack.c.h.b16 %v845
    %v1648 = vunpack.c.l.b16 %v846
    %v1649 = vunpack.c.h.b16 %v846
    %v1650 = vunpack.c.l.b16 %v847
    %v1651 = vunpack.c.h.b16 %v847
    %v1652 = vunpack.c.l.b16 %v848
    %v1653 = vunpack.c.h.b16 %v848
    %v1654 = vunpack.c.l.b16 %v849
    %v1655 = vunpack.c.h.b16 %v849
    %v1656 = vunpack.c.l.b16 %v850
    %v1657 = vunpack.c.l.b16 %v851
    %v1658 = vunpack.c.h.b16 %v851
    %v1659 = vunpack.c.l.b16 %v852
    %v1660 = vunpack.c.h.b16 %v852
    %v1661 = vunpack.c.l.b16 %v853
    %v1662 = vunpack.c.h.b16 %v853
    %v1663 = vunpack.c.l.b16 %v854
    %v1664 = vunpack.c.h.b16 %v854
    %v1665 = vunpack.c.l.b16 %v855
    %v1666 = vunpack.c.h.b16 %v855
    %v1667 = vunpack.c.l.b16 %v856
    %v1668 = vunpack.c.l.b16 %v857
    %v1669 = vunpack.c.h.b16 %v857
    %v1670 = vunpack.c.l.b16 %v858
    %v1671 = vunpack.c.h.b16 %v858
    %v1672 = vunpack.c.l.b16 %v859
    %v1673 = vunpack.c.h.b16 %v859
    %v1674 = vunpack.c.l.b16 %v860
    %v1675 = vunpack.c.h.b16 %v860
    %v1676 = vunpack.c.l.b16 %v861
    %v1677 = vunpack.c.h.b16 %v861
    %v1678 = vunpack.c.l.b16 %v862
    %v1679 = vpack.c.b16 %v1162, %v1151
    %v1680 = vpack.c.b16 %v1163, %v1152
    %v1681 = vpack.c.b16 %v1164, %v1153
    %v1682 = vpack.c.b16 %v1165, %v1154
    %v1683 = vpack.c.b16 %v1166, %v1155
    %v1684 = vpack.c.b16 %v1167, %v1156
    %v1685 = vpack.c.b16 %v1168, %v1157
    %v1686 = vpack.c.b16 %v1169, %v1158
    %v1687 = vpack.c.b16 %v1170, %v1159
    %v1688 = vpack.c.b16 %v1171, %v1160
    %v1689 = vpack.c.b16 %v1172, %v1161
    %v1690 = vpack.c.b16 %v1184, %v1173
    %v1691 = vpack.c.b16 %v1185, %v1174
    %v1692 = vpack.c.b16 %v1186, %v1175
    %v1693 = vpack.c.b16 %v1187, %v1176
    %v1694 = vpack.c.b16 %v1188, %v1177
    %v1695 = vpack.c.b16 %v1189, %v1178
    %v1696 = vpack.c.b16 %v1190, %v1179
    %v1697 = vpack.c.b16 %v1191, %v1180
    %v1698 = vpack.c.b16 %v1192, %v1181
    %v1699 = vpack.c.b16 %v1193, %v1182
    %v1700 = vpack.c.b16 %v1194, %v1183
    %v1701 = vpack.c.b16 %v1206, %v1195
    %v1702 = vpack.c.b16 %v1207, %v1196
    %v1703 = vpack.c.b16 %v1208, %v1197
    %v1704 = vpack.c.b16 %v1209, %v1198
    %v1705 = vpack.c.b16 %v1210, %v1199
    %v1706 = vpack.c.b16 %v1211, %v1200
    %v1707 = vpack.c.b16 %v1212, %v1201
    %v1708 = vpack.c.b16 %v1213, %v1202
    %v1709 = vpack.c.b16 %v1214, %v1203
    %v1710 = vpack.c.b16 %v1215, %v1204
    %v1711 = vpack.c.b16 %v1216, %v1205
    %v1712 = vpack.c.b16 %v1228, %v1217
    %v1713 = vpack.c.b16 %v1229, %v1218
    %v1714 = vpack.c.b16 %v1230, %v1219
    %v1715 = vpack.c.b16 %v1231, %v1220
    %v1716 = vpack.c.b16 %v1232, %v1221
    %v1717 = vpack.c.b16 %v1233, %v1222
    %v1718 = vpack.c.b16 %v1234, %v1223
    %v1719 = vpack.c.b16 %v1235, %v1224
    %v1720 = vpack.c.b16 %v1236, %v1225
    %v1721 = vpack.c.b16 %v1237, %v1226
    %v1722 = vpack.c.b16 %v1238, %v1227
    %v1723 = vpack.c.b16 %v1250, %v1239
    %v1724 = vpack.c.b16 %v1251, %v1240
    %v1725 = vpack.c.b16 %v1252, %v1241
    %v1726 = vpack.c.b16 %v1253, %v1242
    %v1727 = vpack.c.b16 %v1254, %v1243
    %v1728 = vpack.c.b16 %v1255, %v1244
    %v1729 = vpack.c.b16 %v1256, %v1245
    %v1730 = vpack.c.b16 %v1257, %v1246
    %v1731 = vpack.c.b16 %v1258, %v1247
    %v1732 = vpack.c.b16 %v1259, %v1248
    %v1733 = vpack.c.b16 %v1260, %v1249
    %v1734 = vpack.c.b16 %v1272, %v1261
    %v1735 = vpack.c.b16 %v1273, %v1262
    %v1736 = vpack.c.b16 %v1274, %v1263
    %v1737 = vpack.c.b16 %v1275, %v1264
    %v1738 = vpack.c.b16 %v1276, %v1265
    %v1739 = vpack.c.b16 %v1277, %v1266
    %v1740 = vpack.c.b16 %v1278, %v1267
    %v1741 = vpack.c.b16 %v1279, %v1268
    %v1742 = vpack.c.b16 %v1280, %v1269
    %v1743 = vpack.c.b16 %v1281, %v1270
    %v1744 = vpack.c.b16 %v1282, %v1271
    %v1745 = vpack.c.b16 %v1294, %v1283
    %v1746 = vpack.c.b16 %v1295, %v1284
    %v1747 = vpack.c.b16 %v1296, %v1285
    %v1748 = vpack.c.b16 %v1297, %v1286
    %v1749 = vpack.c.b16 %v1298, %v1287
    %v1750 = vpack.c.b16 %v1299, %v1288
    %v1751 = vpack.c.b16 %v1300, %v1289
    %v1752 = vpack.c.b16 %v1301, %v1290
    %v1753 = vpack.c.b16 %v1302, %v1291
    %v1754 = vpack.c.b16 %v1303, %v1292
    %v1755 = vpack.c.b16 %v1304, %v1293
    %v1756 = vpack.c.b16 %v1316, %v1305
    %v1757 = vpack.c.b16 %v1317, %v1306
    %v1758 = vpack.c.b16 %v1318, %v1307
    %v1759 = vpack.c.b16 %v1319, %v1308
    %v1760 = vpack.c.b16 %v1320, %v1309
    %v1761 = vpack.c.b16 %v1321, %v1310
    %v1762 = vpack.c.b16 %v1322, %v1311
    %v1763 = vpack.c.b16 %v1323, %v1312
    %v1764 = vpack.c.b16 %v1324, %v1313
    %v1765 = vpack.c.b16 %v1325, %v1314
    %v1766 = vpack.c.b16 %v1326, %v1315
    %v1767 = vpack.c.b16 %v1338, %v1327
    %v1768 = vpack.c.b16 %v1339, %v1328
    %v1769 = vpack.c.b16 %v1340, %v1329
    %v1770 = vpack.c.b16 %v1341, %v1330
    %v1771 = vpack.c.b16 %v1342, %v1331
    %v1772 = vpack.c.b16 %v1343, %v1332
    %v1773 = vpack.c.b16 %v1344, %v1333
    %v1774 = vpack.c.b16 %v1345, %v1334
    %v1775 = vpack.c.b16 %v1346, %v1335
    %v1776 = vpack.c.b16 %v1347, %v1336
    %v1777 = vpack.c.b16 %v1348, %v1337
    %v1778 = vpack.c.b16 %v1360, %v1349
    %v1779 = vpack.c.b16 %v1361, %v1350
    %v1780 = vpack.c.b16 %v1362, %v1351
    %v1781 = vpack.c.b16 %v1363, %v1352
    %v1782 = vpack.c.b16 %v1364, %v1353
    %v1783 = vpack.c.b16 %v1365, %v1354
    %v1784 = vpack.c.b16 %v1366, %v1355
    %v1785 = vpack.c.b16 %v1367, %v1356
    %v1786 = vpack.c.b16 %v1368, %v1357
    %v1787 = vpack.c.b16 %v1369, %v1358
    %v1788 = vpack.c.b16 %v1370, %v1359
    %v1789 = vpack.c.b16 %v1382, %v1371
    %v1790 = vpack.c.b16 %v1383, %v1372
    %v1791 = vpack.c.b16 %v1384, %v1373
    %v1792 = vpack.c.b16 %v1385, %v1374
    %v1793 = vpack.c.b16 %v1386, %v1375
    %v1794 = vpack.c.b16 %v1387, %v1376
    %v1795 = vpack.c.b16 %v1388, %v1377
    %v1796 = vpack.c.b16 %v1389, %v1378
    %v1797 = vpack.c.b16 %v1390, %v1379
    %v1798 = vpack.c.b16 %v1391, %v1380
    %v1799 = vpack.c.b16 %v1392, %v1381
    %v1800 = vpack.c.b16 %v1404, %v1393
    %v1801 = vpack.c.b16 %v1405, %v1394
    %v1802 = vpack.c.b16 %v1406, %v1395
    %v1803 = vpack.c.b16 %v1407, %v1396
    %v1804 = vpack.c.b16 %v1408, %v1397
    %v1805 = vpack.c.b16 %v1409, %v1398
    %v1806 = vpack.c.b16 %v1410, %v1399
    %v1807 = vpack.c.b16 %v1411, %v1400
    %v1808 = vpack.c.b16 %v1412, %v1401
    %v1809 = vpack.c.b16 %v1413, %v1402
    %v1810 = vpack.c.b16 %v1414, %v1403
    %v1811 = vpack.c.b16 %v1426, %v1415
    %v1812 = vpack.c.b16 %v1427, %v1416
    %v1813 = vpack.c.b16 %v1428, %v1417
    %v1814 = vpack.c.b16 %v1429, %v1418
    %v1815 = vpack.c.b16 %v1430, %v1419
    %v1816 = vpack.c.b16 %v1431, %v1420
    %v1817 = vpack.c.b16 %v1432, %v1421
    %v1818 = vpack.c.b16 %v1433, %v1422
    %v1819 = vpack.c.b16 %v1434, %v1423
    %v1820 = vpack.c.b16 %v1435, %v1424
    %v1821 = vpack.c.b16 %v1436, %v1425
    %v1822 = vpack.c.b16 %v1448, %v1437
    %v1823 = vpack.c.b16 %v1449, %v1438
    %v1824 = vpack.c.b16 %v1450, %v1439
    %v1825 = vpack.c.b16 %v1451, %v1440
    %v1826 = vpack.c.b16 %v1452, %v1441
    %v1827 = vpack.c.b16 %v1453, %v1442
    %v1828 = vpack.c.b16 %v1454, %v1443
    %v1829 = vpack.c.b16 %v1455, %v1444
    %v1830 = vpack.c.b16 %v1456, %v1445
    %v1831 = vpack.c.b16 %v1457, %v1446
    %v1832 = vpack.c.b16 %v1458, %v1447
    %v1833 = vpack.c.b16 %v1470, %v1459
    %v1834 = vpack.c.b16 %v1471, %v1460
    %v1835 = vpack.c.b16 %v1472, %v1461
    %v1836 = vpack.c.b16 %v1473, %v1462
    %v1837 = vpack.c.b16 %v1474, %v1463
    %v1838 = vpack.c.b16 %v1475, %v1464
    %v1839 = vpack.c.b16 %v1476, %v1465
    %v1840 = vpack.c.b16 %v1477, %v1466
    %v1841 = vpack.c.b16 %v1478, %v1467
    %v1842 = vpack.c.b16 %v1479, %v1468
    %v1843 = vpack.c.b16 %v1480, %v1469
    %v1844 = vpack.c.b16 %v1492, %v1481
    %v1845 = vpack.c.b16 %v1493, %v1482
    %v1846 = vpack.c.b16 %v1494, %v1483
    %v1847 = vpack.c.b16 %v1495, %v1484
    %v1848 = vpack.c.b16 %v1496, %v1485
    %v1849 = vpack.c.b16 %v1497, %v1486
    %v1850 = vpack.c.b16 %v1498, %v1487
    %v1851 = vpack.c.b16 %v1499, %v1488
    %v1852 = vpack.c.b16 %v1500, %v1489
    %v1853 = vpack.c.b16 %v1501, %v1490
    %v1854 = vpack.c.b16 %v1502, %v1491
    %v1855 = vpack.c.b16 %v1514, %v1503
    %v1856 = vpack.c.b16 %v1515, %v1504
    %v1857 = vpack.c.b16 %v1516, %v1505
    %v1858 = vpack.c.b16 %v1517, %v1506
    %v1859 = vpack.c.b16 %v1518, %v1507
    %v1860 = vpack.c.b16 %v1519, %v1508
    %v1861 = vpack.c.b16 %v1520, %v1509
    %v1862 = vpack.c.b16 %v1521, %v1510
    %v1863 = vpack.c.b16 %v1522, %v1511
    %v1864 = vpack.c.b16 %v1523, %v1512
    %v1865 = vpack.c.b16 %v1524, %v1513
    %v1866 = vpack.c.b16 %v1536, %v1525
    %v1867 = vpack.c.b16 %v1537, %v1526
    %v1868 = vpack.c.b16 %v1538, %v1527
    %v1869 = vpack.c.b16 %v1539, %v1528
    %v1870 = vpack.c.b16 %v1540, %v1529
    %v1871 = vpack.c.b16 %v1541, %v1530
    %v1872 = vpack.c.b16 %v1542, %v1531
    %v1873 = vpack.c.b16 %v1543, %v1532
    %v1874 = vpack.c.b16 %v1544, %v1533
    %v1875 = vpack.c.b16 %v1545, %v1534
    %v1876 = vpack.c.b16 %v1546, %v1535
    %v1877 = vpack.c.b16 %v1558, %v1547
    %v1878 = vpack.c.b16 %v1559, %v1548
    %v1879 = vpack.c.b16 %v1560, %v1549
    %v1880 = vpack.c.b16 %v1561, %v1550
    %v1881 = vpack.c.b16 %v1562, %v1551
    %v1882 = vpack.c.b16 %v1563, %v1552
    %v1883 = vpack.c.b16 %v1564, %v1553
    %v1884 = vpack.c.b16 %v1565, %v1554
    %v1885 = vpack.c.b16 %v1566, %v1555
    %v1886 = vpack.c.b16 %v1567, %v1556
    %v1887 = vpack.c.b16 %v1568, %v1557
    %v1888 = vpack.c.b16 %v1580, %v1569
    %v1889 = vpack.c.b16 %v1581, %v1570
    %v1890 = vpack.c.b16 %v1582, %v1571
    %v1891 = vpack.c.b16 %v1583, %v1572
    %v1892 = vpack.c.b16 %v1584, %v1573
    %v1893 = vpack.c.b16 %v1585, %v1574
    %v1894 = vpack.c.b16 %v1586, %v1575
    %v1895 = vpack.c.b16 %v1587, %v1576
    %v1896 = vpack.c.b16 %v1588, %v1577
    %v1897 = vpack.c.b16 %v1589, %v1578
    %v1898 = vpack.c.b16 %v1590, %v1579
    %v1899 = vpack.c.b16 %v1602, %v1591
    %v1900 = vpack.c.b16 %v1603, %v1592
    %v1901 = vpack.c.b16 %v1604, %v1593
    %v1902 = vpack.c.b16 %v1605, %v1594
    %v1903 = vpack.c.b16 %v1606, %v1595
    %v1904 = vpack.c.b16 %v1607, %v1596
    %v1905 = vpack.c.b16 %v1608, %v1597
    %v1906 = vpack.c.b16 %v1609, %v1598
    %v1907 = vpack.c.b16 %v1610, %v1599
    %v1908 = vpack.c.b16 %v1611, %v1600
    %v1909 = vpack.c.b16 %v1612, %v1601
    %v1910 = vpack.c.b16 %v1624, %v1613
    %v1911 = vpack.c.b16 %v1625, %v1614
    %v1912 = vpack.c.b16 %v1626, %v1615
    %v1913 = vpack.c.b16 %v1627, %v1616
    %v1914 = vpack.c.b16 %v1628, %v1617
    %v1915 = vpack.c.b16 %v1629, %v1618
    %v1916 = vpack.c.b16 %v1630, %v1619
    %v1917 = vpack.c.b16 %v1631, %v1620
    %v1918 = vpack.c.b16 %v1632, %v1621
    %v1919 = vpack.c.b16 %v1633, %v1622
    %v1920 = vpack.c.b16 %v1634, %v1623
    %v1921 = vpack.c.b16 %v1646, %v1635
    %v1922 = vpack.c.b16 %v1647, %v1636
    %v1923 = vpack.c.b16 %v1648, %v1637
    %v1924 = vpack.c.b16 %v1649, %v1638
    %v1925 = vpack.c.b16 %v1650, %v1639
    %v1926 = vpack.c.b16 %v1651, %v1640
    %v1927 = vpack.c.b16 %v1652, %v1641
    %v1928 = vpack.c.b16 %v1653, %v1642
    %v1929 = vpack.c.b16 %v1654, %v1643
    %v1930 = vpack.c.b16 %v1655, %v1644
    %v1931 = vpack.c.b16 %v1656, %v1645
    %v1932 = vpack.c.b16 %v1668, %v1657
    %v1933 = vpack.c.b16 %v1669, %v1658
    %v1934 = vpack.c.b16 %v1670, %v1659
    %v1935 = vpack.c.b16 %v1671, %v1660
    %v1936 = vpack.c.b16 %v1672, %v1661
    %v1937 = vpack.c.b16 %v1673, %v1662
    %v1938 = vpack.c.b16 %v1674, %v1663
    %v1939 = vpack.c.b16 %v1675, %v1664
    %v1940 = vpack.c.b16 %v1676, %v1665
    %v1941 = vpack.c.b16 %v1677, %v1666
    %v1942 = vpack.c.b16 %v1678, %v1667
    %2207 = vmatpush.bf16.msra.mxu0 %v1756
    %2208 = vmatpush.bf16.msra.mxu0 %v1745
    %2209 = vmatpush.bf16.msra.mxu0 %v1734
    %2210 = vmatpush.bf16.msra.mxu0 %v1723
    %2211 = vmatpush.bf16.msra.mxu0 %v1712
    %2212 = vmatpush.bf16.msra.mxu0 %v1701
    %2213 = vmatpush.bf16.msra.mxu0 %v1690
    %2214 = vmatpush.bf16.msra.mxu0 %v1679
    %2215 = vmatmul.bf16.gmra.mxu0 %v572
    %v2216 = vpop.f32.mrf.mxu0
    %v2217 = vadd.f32 0.0, %v2216
    %v2218 = vpop.f32.mrf.mxu0
    %2219 = vdwg.mxu0
    %2220 = vmatpush.bf16.msra.mxu0 %v1844
    %2221 = vmatpush.bf16.msra.mxu0 %v1833
    %2222 = vmatpush.bf16.msra.mxu0 %v1822
    %2223 = vmatpush.bf16.msra.mxu0 %v1811
    %2224 = vmatpush.bf16.msra.mxu0 %v1800
    %2225 = vmatpush.bf16.msra.mxu0 %v1789
    %2226 = vmatpush.bf16.msra.mxu0 %v1778
    %2227 = vmatpush.bf16.msra.mxu0 %v1767
    %2228 = vmatmul.bf16.gmra.mxu0 %v573
    %v2229 = vpop.f32.mrf.mxu0
    %v2230 = vadd.f32 %v2217, %v2229
    %v2231 = vpop.f32.mrf.mxu0
    %2232 = vdwg.mxu0
    %2233 = vmatpush.bf16.msra.mxu0 %v1932
    %2234 = vmatpush.bf16.msra.mxu0 %v1921
    %2235 = vmatpush.bf16.msra.mxu0 %v1910
    %2236 = vmatpush.bf16.msra.mxu0 %v1899
    %2237 = vmatpush.bf16.msra.mxu0 %v1888
    %2238 = vmatpush.bf16.msra.mxu0 %v1877
    %2239 = vmatpush.bf16.msra.mxu0 %v1866
    %2240 = vmatpush.bf16.msra.mxu0 %v1855
    %2241 = vmatmul.bf16.gmra.mxu0 %v574
    %v2242 = vpop.f32.mrf.mxu0
    %v2243 = vadd.f32 %v2230, %v2242
    %v2244 = vpop.f32.mrf.mxu0
    %2245 = vdwg.mxu0
    %2246 = vmatpush.bf16.msra.mxu0 %v1757
    %2247 = vmatpush.bf16.msra.mxu0 %v1746
    %2248 = vmatpush.bf16.msra.mxu0 %v1735
    %2249 = vmatpush.bf16.msra.mxu0 %v1724
    %2250 = vmatpush.bf16.msra.mxu0 %v1713
    %2251 = vmatpush.bf16.msra.mxu0 %v1702
    %2252 = vmatpush.bf16.msra.mxu0 %v1691
    %2253 = vmatpush.bf16.msra.mxu0 %v1680
    %2254 = vmatmul.bf16.gmra.mxu0 %v572
    %v2255 = vpop.f32.mrf.mxu0
    %v2256 = vadd.f32 0.0, %v2255
    %v2257 = vpop.f32.mrf.mxu0
    %2258 = vdwg.mxu0
    %2259 = vmatpush.bf16.msra.mxu0 %v1845
    %2260 = vmatpush.bf16.msra.mxu0 %v1834
    %2261 = vmatpush.bf16.msra.mxu0 %v1823
    %2262 = vmatpush.bf16.msra.mxu0 %v1812
    %2263 = vmatpush.bf16.msra.mxu0 %v1801
    %2264 = vmatpush.bf16.msra.mxu0 %v1790
    %2265 = vmatpush.bf16.msra.mxu0 %v1779
    %2266 = vmatpush.bf16.msra.mxu0 %v1768
    %2267 = vmatmul.bf16.gmra.mxu0 %v573
    %v2268 = vpop.f32.mrf.mxu0
    %v2269 = vadd.f32 %v2256, %v2268
    %v2270 = vpop.f32.mrf.mxu0
    %2271 = vdwg.mxu0
    %2272 = vmatpush.bf16.msra.mxu0 %v1933
    %2273 = vmatpush.bf16.msra.mxu0 %v1922
    %2274 = vmatpush.bf16.msra.mxu0 %v1911
    %2275 = vmatpush.bf16.msra.mxu0 %v1900
    %2276 = vmatpush.bf16.msra.mxu0 %v1889
    %2277 = vmatpush.bf16.msra.mxu0 %v1878
    %2278 = vmatpush.bf16.msra.mxu0 %v1867
    %2279 = vmatpush.bf16.msra.mxu0 %v1856
    %2280 = vmatmul.bf16.gmra.mxu0 %v574
    %v2281 = vpop.f32.mrf.mxu0
    %v2282 = vadd.f32 %v2269, %v2281
    %v2283 = vpop.f32.mrf.mxu0
    %2284 = vdwg.mxu0
    %2285 = vmatpush.bf16.msra.mxu0 %v1758
    %2286 = vmatpush.bf16.msra.mxu0 %v1747
    %2287 = vmatpush.bf16.msra.mxu0 %v1736
    %2288 = vmatpush.bf16.msra.mxu0 %v1725
    %2289 = vmatpush.bf16.msra.mxu0 %v1714
    %2290 = vmatpush.bf16.msra.mxu0 %v1703
    %2291 = vmatpush.bf16.msra.mxu0 %v1692
    %2292 = vmatpush.bf16.msra.mxu0 %v1681
    %2293 = vmatmul.bf16.gmra.mxu0 %v572
    %v2294 = vpop.f32.mrf.mxu0
    %v2295 = vadd.f32 0.0, %v2294
    %v2296 = vpop.f32.mrf.mxu0
    %2297 = vdwg.mxu0
    %2298 = vmatpush.bf16.msra.mxu0 %v1846
    %2299 = vmatpush.bf16.msra.mxu0 %v1835
    %2300 = vmatpush.bf16.msra.mxu0 %v1824
    %2301 = vmatpush.bf16.msra.mxu0 %v1813
    %2302 = vmatpush.bf16.msra.mxu0 %v1802
    %2303 = vmatpush.bf16.msra.mxu0 %v1791
    %2304 = vmatpush.bf16.msra.mxu0 %v1780
    %2305 = vmatpush.bf16.msra.mxu0 %v1769
    %2306 = vmatmul.bf16.gmra.mxu0 %v573
    %v2307 = vpop.f32.mrf.mxu0
    %v2308 = vadd.f32 %v2295, %v2307
    %v2309 = vpop.f32.mrf.mxu0
    %2310 = vdwg.mxu0
    %2311 = vmatpush.bf16.msra.mxu0 %v1934
    %2312 = vmatpush.bf16.msra.mxu0 %v1923
    %2313 = vmatpush.bf16.msra.mxu0 %v1912
    %2314 = vmatpush.bf16.msra.mxu0 %v1901
    %2315 = vmatpush.bf16.msra.mxu0 %v1890
    %2316 = vmatpush.bf16.msra.mxu0 %v1879
    %2317 = vmatpush.bf16.msra.mxu0 %v1868
    %2318 = vmatpush.bf16.msra.mxu0 %v1857
    %2319 = vmatmul.bf16.gmra.mxu0 %v574
    %v2320 = vpop.f32.mrf.mxu0
    %v2321 = vadd.f32 %v2308, %v2320
    %v2322 = vpop.f32.mrf.mxu0
    %2323 = vdwg.mxu0
    %2324 = vmatpush.bf16.msra.mxu0 %v1759
    %2325 = vmatpush.bf16.msra.mxu0 %v1748
    %2326 = vmatpush.bf16.msra.mxu0 %v1737
    %2327 = vmatpush.bf16.msra.mxu0 %v1726
    %2328 = vmatpush.bf16.msra.mxu0 %v1715
    %2329 = vmatpush.bf16.msra.mxu0 %v1704
    %2330 = vmatpush.bf16.msra.mxu0 %v1693
    %2331 = vmatpush.bf16.msra.mxu0 %v1682
    %2332 = vmatmul.bf16.gmra.mxu0 %v572
    %v2333 = vpop.f32.mrf.mxu0
    %v2334 = vadd.f32 0.0, %v2333
    %v2335 = vpop.f32.mrf.mxu0
    %2336 = vdwg.mxu0
    %2337 = vmatpush.bf16.msra.mxu0 %v1847
    %2338 = vmatpush.bf16.msra.mxu0 %v1836
    %2339 = vmatpush.bf16.msra.mxu0 %v1825
    %2340 = vmatpush.bf16.msra.mxu0 %v1814
    %2341 = vmatpush.bf16.msra.mxu0 %v1803
    %2342 = vmatpush.bf16.msra.mxu0 %v1792
    %2343 = vmatpush.bf16.msra.mxu0 %v1781
    %2344 = vmatpush.bf16.msra.mxu0 %v1770
    %2345 = vmatmul.bf16.gmra.mxu0 %v573
    %v2346 = vpop.f32.mrf.mxu0
    %v2347 = vadd.f32 %v2334, %v2346
    %v2348 = vpop.f32.mrf.mxu0
    %2349 = vdwg.mxu0
    %2350 = vmatpush.bf16.msra.mxu0 %v1935
    %2351 = vmatpush.bf16.msra.mxu0 %v1924
    %2352 = vmatpush.bf16.msra.mxu0 %v1913
    %2353 = vmatpush.bf16.msra.mxu0 %v1902
    %2354 = vmatpush.bf16.msra.mxu0 %v1891
    %2355 = vmatpush.bf16.msra.mxu0 %v1880
    %2356 = vmatpush.bf16.msra.mxu0 %v1869
    %2357 = vmatpush.bf16.msra.mxu0 %v1858
    %2358 = vmatmul.bf16.gmra.mxu0 %v574
    %v2359 = vpop.f32.mrf.mxu0
    %v2360 = vadd.f32 %v2347, %v2359
    %v2361 = vpop.f32.mrf.mxu0
    %2362 = vdwg.mxu0
    %2363 = vmatpush.bf16.msra.mxu0 %v1760
    %2364 = vmatpush.bf16.msra.mxu0 %v1749
    %2365 = vmatpush.bf16.msra.mxu0 %v1738
    %2366 = vmatpush.bf16.msra.mxu0 %v1727
    %2367 = vmatpush.bf16.msra.mxu0 %v1716
    %2368 = vmatpush.bf16.msra.mxu0 %v1705
    %2369 = vmatpush.bf16.msra.mxu0 %v1694
    %2370 = vmatpush.bf16.msra.mxu0 %v1683
    %2371 = vmatmul.bf16.gmra.mxu0 %v572
    %v2372 = vpop.f32.mrf.mxu0
    %v2373 = vadd.f32 0.0, %v2372
    %v2374 = vpop.f32.mrf.mxu0
    %2375 = vdwg.mxu0
    %2376 = vmatpush.bf16.msra.mxu0 %v1848
    %2377 = vmatpush.bf16.msra.mxu0 %v1837
    %2378 = vmatpush.bf16.msra.mxu0 %v1826
    %2379 = vmatpush.bf16.msra.mxu0 %v1815
    %2380 = vmatpush.bf16.msra.mxu0 %v1804
    %2381 = vmatpush.bf16.msra.mxu0 %v1793
    %2382 = vmatpush.bf16.msra.mxu0 %v1782
    %2383 = vmatpush.bf16.msra.mxu0 %v1771
    %2384 = vmatmul.bf16.gmra.mxu0 %v573
    %v2385 = vpop.f32.mrf.mxu0
    %v2386 = vadd.f32 %v2373, %v2385
    %v2387 = vpop.f32.mrf.mxu0
    %2388 = vdwg.mxu0
    %2389 = vmatpush.bf16.msra.mxu0 %v1936
    %2390 = vmatpush.bf16.msra.mxu0 %v1925
    %2391 = vmatpush.bf16.msra.mxu0 %v1914
    %2392 = vmatpush.bf16.msra.mxu0 %v1903
    %2393 = vmatpush.bf16.msra.mxu0 %v1892
    %2394 = vmatpush.bf16.msra.mxu0 %v1881
    %2395 = vmatpush.bf16.msra.mxu0 %v1870
    %2396 = vmatpush.bf16.msra.mxu0 %v1859
    %2397 = vmatmul.bf16.gmra.mxu0 %v574
    %v2398 = vpop.f32.mrf.mxu0
    %v2399 = vadd.f32 %v2386, %v2398
    %v2400 = vpop.f32.mrf.mxu0
    %2401 = vdwg.mxu0
    %2402 = vmatpush.bf16.msra.mxu0 %v1761
    %2403 = vmatpush.bf16.msra.mxu0 %v1750
    %2404 = vmatpush.bf16.msra.mxu0 %v1739
    %2405 = vmatpush.bf16.msra.mxu0 %v1728
    %2406 = vmatpush.bf16.msra.mxu0 %v1717
    %2407 = vmatpush.bf16.msra.mxu0 %v1706
    %2408 = vmatpush.bf16.msra.mxu0 %v1695
    %2409 = vmatpush.bf16.msra.mxu0 %v1684
    %2410 = vmatmul.bf16.gmra.mxu0 %v572
    %v2411 = vpop.f32.mrf.mxu0
    %v2412 = vadd.f32 0.0, %v2411
    %v2413 = vpop.f32.mrf.mxu0
    %2414 = vdwg.mxu0
    %2415 = vmatpush.bf16.msra.mxu0 %v1849
    %2416 = vmatpush.bf16.msra.mxu0 %v1838
    %2417 = vmatpush.bf16.msra.mxu0 %v1827
    %2418 = vmatpush.bf16.msra.mxu0 %v1816
    %2419 = vmatpush.bf16.msra.mxu0 %v1805
    %2420 = vmatpush.bf16.msra.mxu0 %v1794
    %2421 = vmatpush.bf16.msra.mxu0 %v1783
    %2422 = vmatpush.bf16.msra.mxu0 %v1772
    %2423 = vmatmul.bf16.gmra.mxu0 %v573
    %v2424 = vpop.f32.mrf.mxu0
    %v2425 = vadd.f32 %v2412, %v2424
    %v2426 = vpop.f32.mrf.mxu0
    %2427 = vdwg.mxu0
    %2428 = vmatpush.bf16.msra.mxu0 %v1937
    %2429 = vmatpush.bf16.msra.mxu0 %v1926
    %2430 = vmatpush.bf16.msra.mxu0 %v1915
    %2431 = vmatpush.bf16.msra.mxu0 %v1904
    %2432 = vmatpush.bf16.msra.mxu0 %v1893
    %2433 = vmatpush.bf16.msra.mxu0 %v1882
    %2434 = vmatpush.bf16.msra.mxu0 %v1871
    %2435 = vmatpush.bf16.msra.mxu0 %v1860
    %2436 = vmatmul.bf16.gmra.mxu0 %v574
    %v2437 = vpop.f32.mrf.mxu0
    %v2438 = vadd.f32 %v2425, %v2437
    %v2439 = vpop.f32.mrf.mxu0
    %2440 = vdwg.mxu0
    %2441 = vmatpush.bf16.msra.mxu0 %v1762
    %2442 = vmatpush.bf16.msra.mxu0 %v1751
    %2443 = vmatpush.bf16.msra.mxu0 %v1740
    %2444 = vmatpush.bf16.msra.mxu0 %v1729
    %2445 = vmatpush.bf16.msra.mxu0 %v1718
    %2446 = vmatpush.bf16.msra.mxu0 %v1707
    %2447 = vmatpush.bf16.msra.mxu0 %v1696
    %2448 = vmatpush.bf16.msra.mxu0 %v1685
    %2449 = vmatmul.bf16.gmra.mxu0 %v572
    %v2450 = vpop.f32.mrf.mxu0
    %v2451 = vadd.f32 0.0, %v2450
    %v2452 = vpop.f32.mrf.mxu0
    %2453 = vdwg.mxu0
    %2454 = vmatpush.bf16.msra.mxu0 %v1850
    %2455 = vmatpush.bf16.msra.mxu0 %v1839
    %2456 = vmatpush.bf16.msra.mxu0 %v1828
    %2457 = vmatpush.bf16.msra.mxu0 %v1817
    %2458 = vmatpush.bf16.msra.mxu0 %v1806
    %2459 = vmatpush.bf16.msra.mxu0 %v1795
    %2460 = vmatpush.bf16.msra.mxu0 %v1784
    %2461 = vmatpush.bf16.msra.mxu0 %v1773
    %2462 = vmatmul.bf16.gmra.mxu0 %v573
    %v2463 = vpop.f32.mrf.mxu0
    %v2464 = vadd.f32 %v2451, %v2463
    %v2465 = vpop.f32.mrf.mxu0
    %2466 = vdwg.mxu0
    %2467 = vmatpush.bf16.msra.mxu0 %v1938
    %2468 = vmatpush.bf16.msra.mxu0 %v1927
    %2469 = vmatpush.bf16.msra.mxu0 %v1916
    %2470 = vmatpush.bf16.msra.mxu0 %v1905
    %2471 = vmatpush.bf16.msra.mxu0 %v1894
    %2472 = vmatpush.bf16.msra.mxu0 %v1883
    %2473 = vmatpush.bf16.msra.mxu0 %v1872
    %2474 = vmatpush.bf16.msra.mxu0 %v1861
    %2475 = vmatmul.bf16.gmra.mxu0 %v574
    %v2476 = vpop.f32.mrf.mxu0
    %v2477 = vadd.f32 %v2464, %v2476
    %v2478 = vpop.f32.mrf.mxu0
    %2479 = vdwg.mxu0
    %2480 = vmatpush.bf16.msra.mxu0 %v1763
    %2481 = vmatpush.bf16.msra.mxu0 %v1752
    %2482 = vmatpush.bf16.msra.mxu0 %v1741
    %2483 = vmatpush.bf16.msra.mxu0 %v1730
    %2484 = vmatpush.bf16.msra.mxu0 %v1719
    %2485 = vmatpush.bf16.msra.mxu0 %v1708
    %2486 = vmatpush.bf16.msra.mxu0 %v1697
    %2487 = vmatpush.bf16.msra.mxu0 %v1686
    %2488 = vmatmul.bf16.gmra.mxu0 %v572
    %v2489 = vpop.f32.mrf.mxu0
    %v2490 = vadd.f32 0.0, %v2489
    %v2491 = vpop.f32.mrf.mxu0
    %2492 = vdwg.mxu0
    %2493 = vmatpush.bf16.msra.mxu0 %v1851
    %2494 = vmatpush.bf16.msra.mxu0 %v1840
    %2495 = vmatpush.bf16.msra.mxu0 %v1829
    %2496 = vmatpush.bf16.msra.mxu0 %v1818
    %2497 = vmatpush.bf16.msra.mxu0 %v1807
    %2498 = vmatpush.bf16.msra.mxu0 %v1796
    %2499 = vmatpush.bf16.msra.mxu0 %v1785
    %2500 = vmatpush.bf16.msra.mxu0 %v1774
    %2501 = vmatmul.bf16.gmra.mxu0 %v573
    %v2502 = vpop.f32.mrf.mxu0
    %v2503 = vadd.f32 %v2490, %v2502
    %v2504 = vpop.f32.mrf.mxu0
    %2505 = vdwg.mxu0
    %2506 = vmatpush.bf16.msra.mxu0 %v1939
    %2507 = vmatpush.bf16.msra.mxu0 %v1928
    %2508 = vmatpush.bf16.msra.mxu0 %v1917
    %2509 = vmatpush.bf16.msra.mxu0 %v1906
    %2510 = vmatpush.bf16.msra.mxu0 %v1895
    %2511 = vmatpush.bf16.msra.mxu0 %v1884
    %2512 = vmatpush.bf16.msra.mxu0 %v1873
    %2513 = vmatpush.bf16.msra.mxu0 %v1862
    %2514 = vmatmul.bf16.gmra.mxu0 %v574
    %v2515 = vpop.f32.mrf.mxu0
    %v2516 = vadd.f32 %v2503, %v2515
    %v2517 = vpop.f32.mrf.mxu0
    %2518 = vdwg.mxu0
    %2519 = vmatpush.bf16.msra.mxu0 %v1764
    %2520 = vmatpush.bf16.msra.mxu0 %v1753
    %2521 = vmatpush.bf16.msra.mxu0 %v1742
    %2522 = vmatpush.bf16.msra.mxu0 %v1731
    %2523 = vmatpush.bf16.msra.mxu0 %v1720
    %2524 = vmatpush.bf16.msra.mxu0 %v1709
    %2525 = vmatpush.bf16.msra.mxu0 %v1698
    %2526 = vmatpush.bf16.msra.mxu0 %v1687
    %2527 = vmatmul.bf16.gmra.mxu0 %v572
    %v2528 = vpop.f32.mrf.mxu0
    %v2529 = vadd.f32 0.0, %v2528
    %v2530 = vpop.f32.mrf.mxu0
    %2531 = vdwg.mxu0
    %2532 = vmatpush.bf16.msra.mxu0 %v1852
    %2533 = vmatpush.bf16.msra.mxu0 %v1841
    %2534 = vmatpush.bf16.msra.mxu0 %v1830
    %2535 = vmatpush.bf16.msra.mxu0 %v1819
    %2536 = vmatpush.bf16.msra.mxu0 %v1808
    %2537 = vmatpush.bf16.msra.mxu0 %v1797
    %2538 = vmatpush.bf16.msra.mxu0 %v1786
    %2539 = vmatpush.bf16.msra.mxu0 %v1775
    %2540 = vmatmul.bf16.gmra.mxu0 %v573
    %v2541 = vpop.f32.mrf.mxu0
    %v2542 = vadd.f32 %v2529, %v2541
    %v2543 = vpop.f32.mrf.mxu0
    %2544 = vdwg.mxu0
    %2545 = vmatpush.bf16.msra.mxu0 %v1940
    %2546 = vmatpush.bf16.msra.mxu0 %v1929
    %2547 = vmatpush.bf16.msra.mxu0 %v1918
    %2548 = vmatpush.bf16.msra.mxu0 %v1907
    %2549 = vmatpush.bf16.msra.mxu0 %v1896
    %2550 = vmatpush.bf16.msra.mxu0 %v1885
    %2551 = vmatpush.bf16.msra.mxu0 %v1874
    %2552 = vmatpush.bf16.msra.mxu0 %v1863
    %2553 = vmatmul.bf16.gmra.mxu0 %v574
    %v2554 = vpop.f32.mrf.mxu0
    %v2555 = vadd.f32 %v2542, %v2554
    %v2556 = vpop.f32.mrf.mxu0
    %2557 = vdwg.mxu0
    %2558 = vmatpush.bf16.msra.mxu0 %v1765
    %2559 = vmatpush.bf16.msra.mxu0 %v1754
    %2560 = vmatpush.bf16.msra.mxu0 %v1743
    %2561 = vmatpush.bf16.msra.mxu0 %v1732
    %2562 = vmatpush.bf16.msra.mxu0 %v1721
    %2563 = vmatpush.bf16.msra.mxu0 %v1710
    %2564 = vmatpush.bf16.msra.mxu0 %v1699
    %2565 = vmatpush.bf16.msra.mxu0 %v1688
    %2566 = vmatmul.bf16.gmra.mxu0 %v572
    %v2567 = vpop.f32.mrf.mxu0
    %v2568 = vadd.f32 0.0, %v2567
    %v2569 = vpop.f32.mrf.mxu0
    %2570 = vdwg.mxu0
    %2571 = vmatpush.bf16.msra.mxu0 %v1853
    %2572 = vmatpush.bf16.msra.mxu0 %v1842
    %2573 = vmatpush.bf16.msra.mxu0 %v1831
    %2574 = vmatpush.bf16.msra.mxu0 %v1820
    %2575 = vmatpush.bf16.msra.mxu0 %v1809
    %2576 = vmatpush.bf16.msra.mxu0 %v1798
    %2577 = vmatpush.bf16.msra.mxu0 %v1787
    %2578 = vmatpush.bf16.msra.mxu0 %v1776
    %2579 = vmatmul.bf16.gmra.mxu0 %v573
    %v2580 = vpop.f32.mrf.mxu0
    %v2581 = vadd.f32 %v2568, %v2580
    %v2582 = vpop.f32.mrf.mxu0
    %2583 = vdwg.mxu0
    %2584 = vmatpush.bf16.msra.mxu0 %v1941
    %2585 = vmatpush.bf16.msra.mxu0 %v1930
    %2586 = vmatpush.bf16.msra.mxu0 %v1919
    %2587 = vmatpush.bf16.msra.mxu0 %v1908
    %2588 = vmatpush.bf16.msra.mxu0 %v1897
    %2589 = vmatpush.bf16.msra.mxu0 %v1886
    %2590 = vmatpush.bf16.msra.mxu0 %v1875
    %2591 = vmatpush.bf16.msra.mxu0 %v1864
    %2592 = vmatmul.bf16.gmra.mxu0 %v574
    %v2593 = vpop.f32.mrf.mxu0
    %v2594 = vadd.f32 %v2581, %v2593
    %v2595 = vpop.f32.mrf.mxu0
    %2596 = vdwg.mxu0
    %2597 = vmatpush.bf16.msra.mxu0 %v1766
    %2598 = vmatpush.bf16.msra.mxu0 %v1755
    %2599 = vmatpush.bf16.msra.mxu0 %v1744
    %2600 = vmatpush.bf16.msra.mxu0 %v1733
    %2601 = vmatpush.bf16.msra.mxu0 %v1722
    %2602 = vmatpush.bf16.msra.mxu0 %v1711
    %2603 = vmatpush.bf16.msra.mxu0 %v1700
    %2604 = vmatpush.bf16.msra.mxu0 %v1689
    %2605 = vmatmul.bf16.gmra.mxu0 %v572
    %v2606 = vpop.f32.mrf.mxu0
    %v2607 = vadd.f32 0.0, %v2606
    %v2608 = vpop.f32.mrf.mxu0
    %2609 = vdwg.mxu0
    %2610 = vmatpush.bf16.msra.mxu0 %v1854
    %2611 = vmatpush.bf16.msra.mxu0 %v1843
    %2612 = vmatpush.bf16.msra.mxu0 %v1832
    %2613 = vmatpush.bf16.msra.mxu0 %v1821
    %2614 = vmatpush.bf16.msra.mxu0 %v1810
    %2615 = vmatpush.bf16.msra.mxu0 %v1799
    %2616 = vmatpush.bf16.msra.mxu0 %v1788
    %2617 = vmatpush.bf16.msra.mxu0 %v1777
    %2618 = vmatmul.bf16.gmra.mxu0 %v573
    %v2619 = vpop.f32.mrf.mxu0
    %v2620 = vadd.f32 %v2607, %v2619
    %v2621 = vpop.f32.mrf.mxu0
    %2622 = vdwg.mxu0
    %2623 = vmatpush.bf16.msra.mxu0 %v1942
    %2624 = vmatpush.bf16.msra.mxu0 %v1931
    %2625 = vmatpush.bf16.msra.mxu0 %v1920
    %2626 = vmatpush.bf16.msra.mxu0 %v1909
    %2627 = vmatpush.bf16.msra.mxu0 %v1898
    %2628 = vmatpush.bf16.msra.mxu0 %v1887
    %2629 = vmatpush.bf16.msra.mxu0 %v1876
    %2630 = vmatpush.bf16.msra.mxu0 %v1865
    %2631 = vmatmul.bf16.gmra.mxu0 %v574
    %v2632 = vpop.f32.mrf.mxu0
    %v2633 = vadd.f32 %v2620, %v2632
    %v2634 = vpop.f32.mrf.mxu0
    %2635 = vdwg.mxu0
    %v2647 = vrot.slane %v2282, 6
    %v2648 = vrot.slane %v2321, 4
    %v2649 = vrot.slane %v2360, 2
    %v2650 = vrot.slane %v2438, 6
    %v2651 = vrot.slane %v2477, 4
    %v2652 = vrot.slane %v2516, 2
    %v2653 = vrot.slane %v2594, 6
    %v2654 = vrot.slane %v2633, 4
    %vm2655 = vcmask 1041408
    %v2656 = vsel %vm2655, %v2243, %v2647
    %vm2657 = vcmask 1045508
    %v2658 = vsel %vm2657, %v2648, %v2649
    %vm2659 = vcmask 1043456
    %v2660 = vsel %vm2659, %v2656, %v2658
    %v2661 = vsel %vm2655, %v2399, %v2650
    %v2662 = vsel %vm2657, %v2651, %v2652
    %v2663 = vsel %vm2659, %v2661, %v2662
    %v2664 = vsel %vm2655, %v2555, %v2653
    %v2665 = vsel %vm2659, %v2664, %v2654
    %2669 = vst [vmem:[#allocation3] sm:$0xff] %v2660
    %2670 = vst [vmem:[#allocation3 + $0x8] sm:$0xff] %v2663
    %vm2671 = vcmask 1043458
    %vm2672 = vmor %vm2671, %vm2655
    %vm2673 = vcmask 128004
    %vm2674 = vmor %vm2673, %vm2672
    %2675 = vst.msk [vmem:[#allocation3 + $0x10] sm:$0x3f] %vm2674, %v2665
    %v2676 = vld [vmem:[#allocation3] sm:$0xff]
    %v2677 = vld [vmem:[#allocation3 + $0x8] sm:$0xff]
    %v2678 = vld [vmem:[#allocation3 + $0x2] sm:$0xff]
    %v2679 = vld [vmem:[#allocation3 + $0xa] sm:$0xff]
    %2682 = vrot.lane.b32.xlu0 %v2678, 112
    %v2683 = vpop.permute.xlu0 %2682
    %2684 = vrot.lane.b32.xlu0 %v2679, 112
    %v2685 = vpop.permute.xlu0 %2684
    %v2686 = vrot.slane %v2683, 2
    %v2687 = vrot.slane %v2685, 2
    %vm2688 = vcmask 1045504
    %v2689 = vsel %vm2688, %v2686, %v2687
    %vm2690 = vcmask 916480
    %v2691 = vsel %vm2690, %v2683, %v2689
    %v2692 = vsel %vm2690, %v2685, %v2687
    %v2695 = vmax.f32 %v2676, %v2691
    %v2696 = vmax.f32 %v2677, %v2692
    %v2697 = vld [vmem:[#allocation3 + $0x4] sm:$0xff]
    %v2698 = vld [vmem:[#allocation3 + $0xc] sm:$0xff]
    %v2699 = vld [vmem:[#allocation3 + $0x14] sm:$0x3]
    %2703 = vrot.lane.b32.xlu0 %v2697, 96
    %v2704 = vpop.permute.xlu0 %2703
    %2705 = vrot.lane.b32.xlu0 %v2698, 96
    %v2706 = vpop.permute.xlu0 %2705
    %2707 = vrot.lane.b32.xlu0 %v2699, 96
    %v2708 = vpop.permute.xlu0 %2707
    %v2709 = vrot.slane %v2704, 2
    %v2710 = vrot.slane %v2706, 2
    %v2711 = vrot.slane %v2708, 2
    %v2712 = vsel %vm2688, %v2709, %v2710
    %vm2713 = vcmask 785408
    %v2714 = vsel %vm2713, %v2704, %v2712
    %v2715 = vsel %vm2688, %v2710, %v2711
    %v2716 = vsel %vm2713, %v2706, %v2715
    %v2719 = vmax.f32 %v2695, %v2714
    %v2720 = vmax.f32 %v2696, %v2716
    %2723 = vrot.lane.b32.xlu0 %v2719, 112
    %v2724 = vpop.permute.xlu0 %2723
    %2725 = vrot.lane.b32.xlu0 %v2720, 112
    %v2726 = vpop.permute.xlu0 %2725
    %v2727 = vrot.slane %v2724, 2
    %v2728 = vrot.slane %v2726, 2
    %v2729 = vsel %vm2688, %v2727, %v2728
    %v2730 = vsel %vm2690, %v2724, %v2729
    %v2731 = vsel %vm2690, %v2726, %v2728
    %v2734 = vmax.f32 %v2719, %v2730
    %v2735 = vmax.f32 %v2720, %v2731
    %2736 = vrot.lane.b32.xlu0 %v2719, 96
    %v2737 = vpop.permute.xlu0 %2736
    %2738 = vrot.lane.b32.xlu0 %v2720, 96
    %v2739 = vpop.permute.xlu0 %2738
    %v2740 = vrot.slane %v2737, 2
    %v2741 = vrot.slane %v2739, 2
    %v2742 = vsel %vm2688, %v2740, %v2741
    %v2743 = vsel %vm2713, %v2737, %v2742
    %v2744 = vsel %vm2713, %v2739, %v2741
    %v2747 = vmax.f32 %v2734, %v2743
    %v2748 = vmax.f32 %v2735, %v2744
    %vm2749 = vcmask 123904
    %2750 = vst.msk [vmem:[#allocation4] sm:$0x3] %vm2749, %v2747
    %2752 = vrot.lane.b32.xlu0 %v2747, 112
    %v2753 = vpop.permute.xlu0 %2752
    %vm2755 = vcmask 255104
    %2756 = vst.msk [vmem:[#allocation4] sm:$0x3] %vm2755, %v2753
    %2757 = vrot.lane.b32.xlu0 %v2747, 96
    %v2758 = vpop.permute.xlu0 %2757
    %vm2760 = vcmask 386304
    %2761 = vst.msk [vmem:[#allocation4] sm:$0x3] %vm2760, %v2758
    %2762 = vrot.lane.b32.xlu0 %v2747, 80
    %v2763 = vpop.permute.xlu0 %2762
    %vm2765 = vcmask 517504
    %2766 = vst.msk [vmem:[#allocation4] sm:$0x3] %vm2765, %v2763
    %2767 = vrot.lane.b32.xlu0 %v2747, 32
    %v2768 = vpop.permute.xlu0 %2767
    %v2769 = vrot.slane %v2768, 2
    %v2770 = vrot.slane %v2768, 4
    %vm2771 = vcmask 261120
    %v2772 = vsel %vm2771, %v2769, %v2770
    %vm2774 = vcmask 648704
    %2775 = vst.msk [vmem:[#allocation4] sm:$0x3] %vm2774, %v2772
    %2776 = vrot.lane.b32.xlu0 %v2747, 16
    %v2777 = vpop.permute.xlu0 %2776
    %v2778 = vrot.slane %v2777, 2
    %v2779 = vrot.slane %v2777, 4
    %vm2780 = vcmask 130048
    %v2781 = vsel %vm2780, %v2778, %v2779
    %vm2783 = vcmask 779904
    %2784 = vst.msk [vmem:[#allocation4] sm:$0x3] %vm2783, %v2781
    %v2785 = vrot.slane %v2747, 4
    %vm2787 = vcmask 911104
    %2788 = vst.msk [vmem:[#allocation4] sm:$0x3] %vm2787, %v2785
    %v2789 = vrot.slane %v2753, 4
    %v2790 = vrot.slane %v2753, 6
    %v2791 = vsel %vm2690, %v2789, %v2790
    %vm2793 = vcmask 1042304
    %2794 = vst.msk [vmem:[#allocation4] sm:$0x3] %vm2793, %v2791
    %2796 = vrot.lane.b32.xlu0 %v2748, 64
    %v2797 = vpop.permute.xlu0 %2796
    %2799 = vst.msk [vmem:[#allocation4 + $0x2] sm:$0x3] %vm2749, %v2797
    %2800 = vrot.lane.b32.xlu0 %v2748, 48
    %v2801 = vpop.permute.xlu0 %2800
    %2803 = vst.msk [vmem:[#allocation4 + $0x2] sm:$0x3] %vm2755, %v2801
    %2804 = vrot.lane.b32.xlu0 %v2748, 32
    %v2805 = vpop.permute.xlu0 %2804
    %v2806 = vrot.slane %v2805, 2
    %v2807 = vsel %vm2771, %v2805, %v2806
    %2809 = vst.msk [vmem:[#allocation4 + $0x2] sm:$0x3] %vm2760, %v2807
    %2810 = vrot.lane.b32.xlu0 %v2748, 16
    %v2811 = vpop.permute.xlu0 %2810
    %v2812 = vrot.slane %v2811, 2
    %v2813 = vsel %vm2780, %v2811, %v2812
    %2815 = vst.msk [vmem:[#allocation4 + $0x2] sm:$0x3] %vm2765, %v2813
    %2816 = vrot.lane.b32.xlu0 %v2748, 96
    %v2817 = vpop.permute.xlu0 %2816
    %v2818 = vrot.slane %v2817, 4
    %2820 = vst.msk [vmem:[#allocation4 + $0x2] sm:$0x3] %vm2774, %v2818
    %2821 = vrot.lane.b32.xlu0 %v2748, 80
    %v2822 = vpop.permute.xlu0 %2821
    %v2823 = vrot.slane %v2822, 4
    %v2824 = vrot.slane %v2822, 6
    %vm2825 = vcmask 654336
    %v2826 = vsel %vm2825, %v2823, %v2824
    %2828 = vst.msk [vmem:[#allocation4 + $0x2] sm:$0x3] %vm2783, %v2826
    %v2829 = vrot.slane %v2797, 4
    %v2830 = vrot.slane %v2797, 6
    %vm2831 = vcmask 523264
    %v2832 = vsel %vm2831, %v2829, %v2830
    %2834 = vst.msk [vmem:[#allocation4 + $0x2] sm:$0x3] %vm2787, %v2832
    %v2835 = vrot.slane %v2801, 4
    %v2836 = vrot.slane %v2801, 6
    %vm2837 = vcmask 392192
    %v2838 = vsel %vm2837, %v2835, %v2836
    %2840 = vst.msk [vmem:[#allocation4 + $0x2] sm:$0x3] %vm2793, %v2838
    %v2841 = vld [vmem:[#allocation4] sm:$0xf]
    %2843 = vst [vmem:[#allocation1] ss:$4 sm:$0xff] %v2841
    %v2844 = vld.sshfl [vmem:[#allocation1] sm:$0xff pattern:$0x73625140]
    %v2845 = vld.sshfl [vmem:[#allocation1 + $0x8] sm:$0xff pattern:$0x73625140]
    %v2848 = vpack.c.bf16 %v2844, %v2844
    %v2849 = vpack.c.bf16 %v2845, %v2845
    %v2850 = vld [vmem:[%s2] sm:$0xf]
    %v2851 = vld [vmem:[%s2 + $0x4] sm:$0xf]
    %v2852 = vld [vmem:[%s2 + $0x8] sm:$0xf]
    %v2853 = vld [vmem:[%s2 + $0xc] sm:$0xf]
    %v2854 = vld [vmem:[%s2 + $0x10] sm:$0xf]
    %v2855 = vld [vmem:[%s2 + $0x14] sm:$0xf]
    %v2856 = vld [vmem:[%s2 + $0x18] sm:$0xf]
    %v2857 = vld [vmem:[%s2 + $0x1c] sm:$0xf]
    %v2858 = vld [vmem:[%s2 + $0x20] sm:$0xf]
    %v2859 = vld [vmem:[%s2 + $0x24] sm:$0xf]
    %v2860 = vld [vmem:[%s2 + $0x28] sm:$0xf]
    %v2861 = vld [vmem:[%s2 + $0x2c] sm:$0xf]
    %v2862 = vld [vmem:[%s2 + $0x30] sm:$0xf]
    %v2863 = vld [vmem:[%s2 + $0x34] sm:$0xf]
    %v2864 = vld [vmem:[%s2 + $0x38] sm:$0xf]
    %v2865 = vld [vmem:[%s2 + $0x3c] sm:$0xf]
    %v2866 = vld [vmem:[%s2 + $0x40] sm:$0xf]
    %v2867 = vld [vmem:[%s2 + $0x44] sm:$0xf]
    %v2868 = vld [vmem:[%s2 + $0x48] sm:$0xf]
    %v2869 = vld [vmem:[%s2 + $0x4c] sm:$0xf]
    %v2870 = vld [vmem:[%s2 + $0x50] sm:$0xf]
    %v2871 = vld [vmem:[%s2 + $0x54] sm:$0xf]
    %v2872 = vld [vmem:[%s2 + $0x58] sm:$0xf]
    %v2873 = vld [vmem:[%s2 + $0x5c] sm:$0xf]
    %v2874 = vld [vmem:[%s2 + $0x60] sm:$0xf]
    %v2875 = vld [vmem:[%s2 + $0x64] sm:$0xf]
    %v2876 = vld [vmem:[%s2 + $0x68] sm:$0xf]
    %v2877 = vld [vmem:[%s2 + $0x6c] sm:$0xf]
    %v2878 = vld [vmem:[%s2 + $0x70] sm:$0xf]
    %v2879 = vld [vmem:[%s2 + $0x74] sm:$0xf]
    %v2880 = vld [vmem:[%s2 + $0x78] sm:$0xf]
    %v2881 = vld [vmem:[%s2 + $0x7c] sm:$0xf]
    %v2882 = vld [vmem:[%s3] sm:$0x1]
    %v2884 = vperm.slane %v2882, 0
    %v2918 = vunpack.c.l.b16 %v2850
    %v2919 = vunpack.c.l.b16 %v2851
    %v2920 = vunpack.c.l.b16 %v2852
    %v2921 = vunpack.c.l.b16 %v2853
    %v2922 = vunpack.c.l.b16 %v2854
    %v2923 = vunpack.c.l.b16 %v2855
    %v2924 = vunpack.c.l.b16 %v2856
    %v2925 = vunpack.c.l.b16 %v2857
    %v2926 = vunpack.c.l.b16 %v2858
    %v2927 = vunpack.c.l.b16 %v2859
    %v2928 = vunpack.c.l.b16 %v2860
    %v2929 = vunpack.c.l.b16 %v2861
    %v2930 = vunpack.c.l.b16 %v2862
    %v2931 = vunpack.c.l.b16 %v2863
    %v2932 = vunpack.c.l.b16 %v2864
    %v2933 = vunpack.c.l.b16 %v2865
    %v2934 = vunpack.c.l.b16 %v2866
    %v2935 = vunpack.c.l.b16 %v2867
    %v2936 = vunpack.c.l.b16 %v2868
    %v2937 = vunpack.c.l.b16 %v2869
    %v2938 = vunpack.c.l.b16 %v2870
    %v2939 = vunpack.c.l.b16 %v2871
    %v2940 = vunpack.c.l.b16 %v2872
    %v2941 = vunpack.c.l.b16 %v2873
    %v2942 = vunpack.c.l.b16 %v2874
    %v2943 = vunpack.c.l.b16 %v2875
    %v2944 = vunpack.c.l.b16 %v2876
    %v2945 = vunpack.c.l.b16 %v2877
    %v2946 = vunpack.c.l.b16 %v2878
    %v2947 = vunpack.c.l.b16 %v2879
    %v2948 = vunpack.c.l.b16 %v2880
    %v2949 = vunpack.c.l.b16 %v2881
    %v2950 = vpack.c.b16 %v2919, %v2918
    %v2951 = vpack.c.b16 %v2921, %v2920
    %v2952 = vpack.c.b16 %v2923, %v2922
    %v2953 = vpack.c.b16 %v2925, %v2924
    %v2954 = vpack.c.b16 %v2927, %v2926
    %v2955 = vpack.c.b16 %v2929, %v2928
    %v2956 = vpack.c.b16 %v2931, %v2930
    %v2957 = vpack.c.b16 %v2933, %v2932
    %v2958 = vpack.c.b16 %v2935, %v2934
    %v2959 = vpack.c.b16 %v2937, %v2936
    %v2960 = vpack.c.b16 %v2939, %v2938
    %v2961 = vpack.c.b16 %v2941, %v2940
    %v2962 = vpack.c.b16 %v2943, %v2942
    %v2963 = vpack.c.b16 %v2945, %v2944
    %v2964 = vpack.c.b16 %v2947, %v2946
    %v2965 = vpack.c.b16 %v2949, %v2948
    %2982 = vmatpush.bf16.msra.mxu0 %v2957
    %2983 = vmatpush.bf16.msra.mxu0 %v2956
    %2984 = vmatpush.bf16.msra.mxu0 %v2955
    %2985 = vmatpush.bf16.msra.mxu0 %v2954
    %2986 = vmatpush.bf16.msra.mxu0 %v2953
    %2987 = vmatpush.bf16.msra.mxu0 %v2952
    %2988 = vmatpush.bf16.msra.mxu0 %v2951
    %2989 = vmatpush.bf16.msra.mxu0 %v2950
    %2990 = vmatmul.bf16.gmra.mxu0 %v2848
    %v2991 = vpop.f32.mrf.mxu0
    %v2992 = vadd.f32 %v2884, %v2991
    %v2993 = vpop.f32.mrf.mxu0
    %2994 = vdwg.mxu0
    %2995 = vmatpush.bf16.msra.mxu0 %v2965
    %2996 = vmatpush.bf16.msra.mxu0 %v2964
    %2997 = vmatpush.bf16.msra.mxu0 %v2963
    %2998 = vmatpush.bf16.msra.mxu0 %v2962
    %2999 = vmatpush.bf16.msra.mxu0 %v2961
    %3000 = vmatpush.bf16.msra.mxu0 %v2960
    %3001 = vmatpush.bf16.msra.mxu0 %v2959
    %3002 = vmatpush.bf16.msra.mxu0 %v2958
    %3003 = vmatmul.bf16.gmra.mxu0 %v2849
    %v3004 = vpop.f32.mrf.mxu0
    %v3005 = vadd.f32 %v2992, %v3004
    %v3006 = vpop.f32.mrf.mxu0
    %3007 = vdwg.mxu0
    %3008 = vst [vmem:[#allocation5] sm:$0x3] %v3005
    // Predicated region
    $region18: #{net12_forward.1} parent=1 // pred_check
      _
    $region19: #{net12_forward.1} parent=1 // pred_check_branch
      %3010 = sbr.rel (0) target = $region21
    $region20: #{net12_forward.1} parent=1 // pred_region
      %3012 = vsyncadd [#allocation6], 0
      %s3014 = sshll.u32 [#allocation5], 4
      %s3015 = int_to_ptr.vmem [resolvable:$true] %s3014
      %s3016 = sshll.u32 %s4, 4
      %s3017 = int_to_ptr.hbm [resolvable:$true] %s3016
      %3019 = dma.vmem_to_hbm [thread:$0]  %s3015, 32, %s3017, [#allocation6]
    $region21: #{net12_forward.1} parent=1 // pred_fallthru
      _
    // Predicated region
    $region22: #{net12_forward.1} parent=1 // pred_check
      _
    $region23: #{net12_forward.1} parent=1 // pred_check_branch
      %3021 = sbr.rel (0) target = $region25
    $region24: #{net12_forward.1} parent=1 // pred_region
      %3023 = dma.done [#allocation6], 32
    $region25: #{net12_forward.1} parent=1 // pred_fallthru
      _
    %3024 = vsyncpa [#allocation6], 1

</llo_original>
